<compile_context>
chip_gen: v5e
topology: v5e:2x2
jax: 0.10.0
libtpu: 0.0.40
codegen_flags: <defaults>
</compile_context>

<pallas_src>
import math
from functools import partial

import jax
import jax.numpy as jnp
from jax.experimental import pallas as pl
from jax.experimental.pallas import tpu as pltpu


def _round_up(v, m):
    return (v + m - 1) // m * m


def _pad2(x, shape, dtype=None):
    out = jnp.zeros(shape, x.dtype if dtype is None else dtype)
    return out.at[: x.shape[0], : x.shape[1]].set(x.astype(out.dtype))


def _mxu(a, b):
    """MXU matmul with bf16 feeds and f32 accumulation."""
    return jnp.dot(a.astype(jnp.bfloat16), b.astype(jnp.bfloat16),
                   preferred_element_type=jnp.float32)


def hamcon_kernel(xf0_ref, a_ref, w1_ref, b1_ref, w2_ref, b2_ref,
                  w1ts_ref, w2t_ref, gz2_ref,
                  out_ref, xf_scr, *, nhid_pad):
    """One grid step == one HAMCON layer iteration.

    Grid axis 0 runs sequentially ("arbitrary"); the [X | Y] state lives in one
    VMEM scratch across iterations.  A_hat is symmetric, so A == A^T everywhere
    in the analytic backward pass.  Encoder/decoder run outside the kernel.
    """
    i = pl.program_id(0)
    nsteps = pl.num_programs(0)

    @pl.when(i == 0)
    def _():
        # state init from the XLA-computed encoder output: xf0 = [Y0 | Y0]
        xf_scr[...] = xf0_ref[...]

    A = a_ref[...]                       # bf16 (Np, Np), symmetric
    xf = xf_scr[...]                     # f32 state [X | Y], (Np, 2*hp)

    # ---- forward pass of H (GCNConv: out = A_hat @ (z @ W) + b) ----
    z1 = jnp.tanh(_mxu(A, _mxu(xf, w1_ref[...])) + b1_ref[...])   # (Np, 2*hp)
    z2 = jnp.tanh(_mxu(A, _mxu(z1, w2_ref[...])) + b2_ref[...])   # (Np, hp)
    # layer-3 output itself is not needed — only its gradient (seeded by gz2).

    # ---- backward: f_full = d( sum_nodes H(xf) ) / d(xf) ----
    # gz2 = colsum(A_hat) (x) W3^T is iteration-invariant and precomputed.
    ga2 = gz2_ref[...] * (1.0 - z2 * z2)                          # (Np, hp) f32
    gz1 = _mxu(_mxu(A, ga2), w2t_ref[...])                        # (Np, 2*hp)
    ga1 = gz1 * (1.0 - z1 * z1)

    # state update: the half-swap and (+dt | -dt) scaling are folded into
    # W1T_swapped, so  xf <- xf + (A @ ga1) @ W1T_swapped  realizes
    #   X <- X + dt * f_full[:, hp:]     and     Y <- Y - dt * f_full[:, :hp]
    xf_scr[...] = xf + _mxu(_mxu(A, ga1), w1ts_ref[...])

    @pl.when(i == nsteps - 1)
    def _():
        out_ref[...] = xf_scr[:, :nhid_pad]    # X half; decoder runs in XLA


def prepare_padded_inputs(x, a_hat, params, dt):
    """Lane-dense (128-padded), bf16-MXU-feed layout; iteration invariants hoisted."""
    N, _ = x.shape
    nhid = params["We"].shape[1]
    nclass = params["Wd"].shape[1]
    Np = _round_up(N, 128)          # node dim == contraction dim of every A@(.)
    hp = _round_up(nhid, 128)
    f32, bf16 = jnp.float32, jnp.bfloat16

    a_pad_f32 = _pad2(a_hat, (Np, Np), f32)
    ap = a_pad_f32.astype(bf16)

    # ---- encoder hoisted into plain XLA (touched once, kept out of VMEM) ----
    y0 = jnp.maximum(x.astype(f32) @ params["We"] + params["be"], 0.0)  # (N, nhid)
    xf0 = jnp.zeros((Np, 2 * hp), f32)
    xf0 = xf0.at[:N, :nhid].set(y0)
    xf0 = xf0.at[:N, hp:hp + nhid].set(y0)

    # W1 acts on [X | Y] — block-embed the 2x2 (nhid x nhid) blocks at the
    # padded offsets so the padded lane layout stays consistent.
    W1, b1 = params["W1"], params["b1"]
    W1p = jnp.zeros((2 * hp, 2 * hp), f32)
    W1p = W1p.at[:nhid, :nhid].set(W1[:nhid, :nhid])
    W1p = W1p.at[:nhid, hp:hp + nhid].set(W1[:nhid, nhid:])
    W1p = W1p.at[hp:hp + nhid, :nhid].set(W1[nhid:, :nhid])
    W1p = W1p.at[hp:hp + nhid, hp:hp + nhid].set(W1[nhid:, nhid:])
    b1p = (jnp.zeros((1, 2 * hp), f32)
           .at[:, :nhid].set(b1[:, :nhid])
           .at[:, hp:hp + nhid].set(b1[:, nhid:]))

    W2, b2 = params["W2"], params["b2"]
    W2p = jnp.zeros((2 * hp, hp), f32)
    W2p = W2p.at[:nhid, :nhid].set(W2[:nhid, :])
    W2p = W2p.at[hp:hp + nhid, :nhid].set(W2[nhid:, :])
    b2p = _pad2(b2, (1, hp), f32)

    W3p = _pad2(params["W3"], (hp, 1), f32)

    # Iteration-invariant backward seed:
    #   d sum(H) / d(z2 @ W3) = A_hat^T @ 1 = colsum(A_hat);  gz2 = colsum (x) W3^T
    gz2 = (jnp.sum(a_pad_f32, axis=0)[:, None] * W3p[:, 0][None, :]).astype(bf16)

    # Pre-transposed weight with the half-swap and (+dt | -dt) folded in:
    #   update = (A @ ga1) @ [ +dt*W1T[:, hp:] | -dt*W1T[:, :hp] ]
    W1T = W1p.T
    W1TS = jnp.concatenate([dt * W1T[:, hp:], -dt * W1T[:, :hp]], axis=1).astype(bf16)
    W2T = W2p.T.astype(bf16)

    args = (xf0, ap, W1p.astype(bf16), b1p, W2p.astype(bf16), b2p,
            W1TS, W2T, gz2)
    dims = dict(N=N, nhid=nhid, nclass=nclass, Np=Np, hp=hp)
    return args, dims


def hamcon_gcn_forward(x, a_hat, params, *, nlayers, dt):
    args, d = prepare_padded_inputs(x, a_hat, params, dt)
    Np, hp = d["Np"], d["hp"]

    def full_spec(arr):
        # full-array block, same block every grid step (resident in VMEM)
        nd = arr.ndim
        return pl.BlockSpec(arr.shape, lambda *_: (0,) * nd)

    kernel = partial(hamcon_kernel, nhid_pad=hp)

    per_layer_flops = 2 * (Np * (2 * hp) * (2 * hp)   # xf @ W1
                           + Np * Np * (2 * hp)       # A @ (.)
                           + Np * (2 * hp) * hp       # z1 @ W2
                           + Np * Np * hp             # A @ (.)
                           + Np * Np * hp             # A @ ga2
                           + Np * hp * (2 * hp)       # (.) @ W2^T
                           + Np * Np * (2 * hp)       # A @ ga1
                           + Np * (2 * hp) * (2 * hp))  # (.) @ W1T_swapped
    flops = int(nlayers * per_layer_flops)
    transcendentals = int(nlayers * Np * 3 * hp)

    in_bytes = sum(int(a.size) * a.dtype.itemsize for a in args)
    out_bytes = Np * hp * 4
    scratch_bytes = Np * 2 * hp * 4
    # size the VMEM limit from the actual resident footprint (double-buffered
    # inputs + output + scratch) plus compiler slack, clamped to sane bounds.
    vmem_limit = int(min(max(2 * (in_bytes + out_bytes) + scratch_bytes
                             + (8 << 20), 16 << 20), 100 << 20))

    xf_out = pl.pallas_call(
        kernel,
        out_shape=jax.ShapeDtypeStruct((Np, hp), jnp.float32),
        grid_spec=pltpu.PrefetchScalarGridSpec(
            num_scalar_prefetch=0,
            grid=(nlayers,),
            in_specs=[full_spec(a) for a in args],
            out_specs=pl.BlockSpec((Np, hp), lambda i: (0, 0)),
            scratch_shapes=[pltpu.VMEM((Np, 2 * hp), jnp.float32)],  # [X | Y] state
        ),
        compiler_params=pltpu.CompilerParams(
            dimension_semantics=("arbitrary",),
            vmem_limit_bytes=vmem_limit),
        cost_estimate=pl.CostEstimate(
            flops=flops, transcendentals=transcendentals,
            bytes_accessed=int(in_bytes + out_bytes)),
    )(*args)

    # ---- decoder hoisted into plain XLA (f32) ----
    X = xf_out[: d["N"], : d["nhid"]]
    return X @ params["Wd"] + params["bd"]


def build_a_hat(src, dst, num_nodes):
    """Dense PyG gcn_norm: D^-1/2 (A + I) D^-1/2 with self loops (symmetric)."""
    A = jnp.zeros((num_nodes, num_nodes), jnp.float32)
    A = A.at[src, dst].set(1.0)
    idx = jnp.arange(num_nodes)
    A = A.at[idx, idx].set(1.0)
    deg = jnp.sum(A, axis=1)
    dinv = 1.0 / jnp.sqrt(deg)
    return A * dinv[:, None] * dinv[None, :]


if __name__ == "__main__":
    # Small shapes consistent with the module: N nodes, nfeat -> nhid -> nclass
    N, nfeat, nhid, nclass = 16, 8, 32, 4
    nlayers, dt = 2, 1.0

    key = jax.random.PRNGKey(0)
    keys = jax.random.split(key, 12)
    stdv = 1.0 / math.sqrt(nhid)

    def u(k, shape):
        return jax.random.uniform(k, shape, jnp.float32, -stdv, stdv)

    params = dict(
        We=u(keys[0], (nfeat, nhid)),        be=u(keys[1], (1, nhid)),       # enc
        W1=u(keys[2], (2 * nhid, 2 * nhid)), b1=u(keys[3], (1, 2 * nhid)),   # H.layer1
        W2=u(keys[4], (2 * nhid, nhid)),     b2=u(keys[5], (1, nhid)),       # H.layer2
        W3=u(keys[6], (nhid, 1)),            b3=u(keys[7], (1, 1)),          # H.layer3
        Wd=u(keys[8], (nhid, nclass)),       bd=u(keys[9], (1, nclass)),     # dec
    )

    x = jax.random.normal(keys[10], (N, nfeat), jnp.float32)

    # deterministic undirected ring graph -> edge_index
    ring = jnp.arange(N)
    src = jnp.concatenate([ring, (ring + 1) % N])
    dst = jnp.concatenate([(ring + 1) % N, ring])
    a_hat = build_a_hat(src, dst, N)

    out = hamcon_gcn_forward(x, a_hat, params, nlayers=nlayers, dt=dt)
    out = jax.block_until_ready(out)
    assert out.shape == (N, nclass)

    # ---- check 1 (tight): pure-JAX mirror of the kernel math with identical
    #      padded / bf16-fed operands ----
    m_args, m_d = prepare_padded_inputs(x, a_hat, params, dt)
    (xf0, ap, W1b, b1p, W2b, b2p, W1TS, W2T, gz2) = m_args
    hp = m_d["hp"]

    xf = xf0
    for _ in range(nlayers):
        z1 = jnp.tanh(_mxu(ap, _mxu(xf, W1b)) + b1p)
        z2 = jnp.tanh(_mxu(ap, _mxu(z1, W2b)) + b2p)
        ga2 = gz2 * (1.0 - z2 * z2)
        gz1 = _mxu(_mxu(ap, ga2), W2T)
        ga1 = gz1 * (1.0 - z1 * z1)
        xf = xf + _mxu(_mxu(ap, ga1), W1TS)
    mirror = xf[:N, :nhid] @ params["Wd"] + params["bd"]
    assert jnp.allclose(out, mirror, rtol=1e-3, atol=1e-3), (out, mirror)

    # ---- check 2 (loose): full-f32 jax.grad reference (validates the in-kernel
    #      analytic jacobian of sum(H(x)) and the padding scheme; bf16 MXU feeds
    #      loosen the tolerance) ----
    def H_apply(xf_):
        z1_ = jnp.tanh(a_hat @ (xf_ @ params["W1"]) + params["b1"])
        z2_ = jnp.tanh(a_hat @ (z1_ @ params["W2"]) + params["b2"])
        return a_hat @ (z2_ @ params["W3"]) + params["b3"]

    Y = jax.nn.relu(x @ params["We"] + params["be"])
    X = Y
    for _ in range(nlayers):
        xf_ref = jnp.concatenate([X, Y], axis=1)
        f_ref = jax.grad(lambda xx: jnp.sum(H_apply(xx)))(xf_ref)
        dx = f_ref[:, nhid:]
        dv = -f_ref[:, :nhid]
        Y = Y + dt * dv
        X = X + dt * dx
    ref = X @ params["Wd"] + params["bd"]
    assert jnp.allclose(out, ref, rtol=2e-2, atol=2e-2), (out, ref)

    print("KERNEL_OK")
</pallas_src>

<mosaic_0001>
module attributes {stable_mosaic.version = 11 : i64} {
  func.func @hamcon_kernel(%arg0: i32, %arg1: memref<128x256xf32, #tpu.memory_space<vmem>>, %arg2: memref<128x128xbf16, #tpu.memory_space<vmem>>, %arg3: memref<256x256xbf16, #tpu.memory_space<vmem>>, %arg4: memref<1x256xf32, #tpu.memory_space<vmem>>, %arg5: memref<256x128xbf16, #tpu.memory_space<vmem>>, %arg6: memref<1x128xf32, #tpu.memory_space<vmem>>, %arg7: memref<256x256xbf16, #tpu.memory_space<vmem>>, %arg8: memref<128x256xbf16, #tpu.memory_space<vmem>>, %arg9: memref<128x128xbf16, #tpu.memory_space<vmem>>, %arg10: memref<128x128xf32, #tpu.memory_space<vmem>>, %arg11: memref<128x256xf32, #tpu.memory_space<vmem>>) attributes {dimension_semantics = [#tpu.dimension_semantics<arbitrary>], iteration_bounds = array<i64: 2>, scalar_prefetch = 0 : i64, scratch_operands = 1 : i64, tpu.core_type = #tpu.core_type<tc>, window_params = [{pipeline_mode = #tpu.pipeline_mode<synchronous>, transform_indices = @transform_0, window_bounds = array<i64: 128, 256>}, {pipeline_mode = #tpu.pipeline_mode<synchronous>, transform_indices = @transform_1, window_bounds = array<i64: 128, 128>}, {pipeline_mode = #tpu.pipeline_mode<synchronous>, transform_indices = @transform_2, window_bounds = array<i64: 256, 256>}, {pipeline_mode = #tpu.pipeline_mode<synchronous>, transform_indices = @transform_3, window_bounds = array<i64: 1, 256>}, {pipeline_mode = #tpu.pipeline_mode<synchronous>, transform_indices = @transform_4, window_bounds = array<i64: 256, 128>}, {pipeline_mode = #tpu.pipeline_mode<synchronous>, transform_indices = @transform_5, window_bounds = array<i64: 1, 128>}, {pipeline_mode = #tpu.pipeline_mode<synchronous>, transform_indices = @transform_6, window_bounds = array<i64: 256, 256>}, {pipeline_mode = #tpu.pipeline_mode<synchronous>, transform_indices = @transform_7, window_bounds = array<i64: 128, 256>}, {pipeline_mode = #tpu.pipeline_mode<synchronous>, transform_indices = @transform_8, window_bounds = array<i64: 128, 128>}, {pipeline_mode = #tpu.pipeline_mode<synchronous>, transform_indices = @transform_9, window_bounds = array<i64: 128, 128>}]} {
    %c0_i32 = arith.constant 0 : i32
    %0 = arith.cmpi eq, %arg0, %c0_i32 : i32
    %1 = arith.extui %0 : i1 to i32
    %c0_i32_0 = arith.constant 0 : i32
    %2 = arith.cmpi ne, %1, %c0_i32_0 : i32
    scf.if %2 {
      %c0_30 = arith.constant 0 : index
      %c0_31 = arith.constant 0 : index
      %48 = vector.load %arg1[%c0_30, %c0_31] : memref<128x256xf32, #tpu.memory_space<vmem>>, vector<128x256xf32>
      %c0_32 = arith.constant 0 : index
      %c0_33 = arith.constant 0 : index
      %49 = vector.load %arg11[%c0_32, %c0_33] : memref<128x256xf32, #tpu.memory_space<vmem>>, vector<128x256xf32>
      tpu.vector_store %arg11[%c0_32, %c0_33], %48 {strides = array<i32>} : memref<128x256xf32, #tpu.memory_space<vmem>>, vector<128x256xf32>,
    } else {
    }
    %c0 = arith.constant 0 : index
    %c0_1 = arith.constant 0 : index
    %3 = vector.load %arg2[%c0, %c0_1] : memref<128x128xbf16, #tpu.memory_space<vmem>>, vector<128x128xbf16>
    %c0_2 = arith.constant 0 : index
    %c0_3 = arith.constant 0 : index
    %4 = vector.load %arg11[%c0_2, %c0_3] : memref<128x256xf32, #tpu.memory_space<vmem>>, vector<128x256xf32>
    %c0_4 = arith.constant 0 : index
    %c0_5 = arith.constant 0 : index
    %5 = vector.load %arg3[%c0_4, %c0_5] : memref<256x256xbf16, #tpu.memory_space<vmem>>, vector<256x256xbf16>
    %6 = arith.truncf %4 : vector<128x256xf32> to vector<128x256xbf16>
    %cst = arith.constant dense<0.000000e+00> : vector<128x256xf32>
    %7 = tpu.matmul %6, %5, %cst {dimension_numbers = #tpu.dot_dimension_numbers<[1], [0], [0], [1], [0, 0, 1, 1], [], []>} : vector<128x256xbf16>, vector<256x256xbf16>, vector<128x256xf32> -> vector<128x256xf32>
    %8 = arith.truncf %7 : vector<128x256xf32> to vector<128x256xbf16>
    %cst_6 = arith.constant dense<0.000000e+00> : vector<128x256xf32>
    %9 = tpu.matmul %3, %8, %cst_6 {dimension_numbers = #tpu.dot_dimension_numbers<[1], [0], [0], [1], [0, 0, 1, 1], [], []>} : vector<128x128xbf16>, vector<128x256xbf16>, vector<128x256xf32> -> vector<128x256xf32>
    %c0_7 = arith.constant 0 : index
    %c0_8 = arith.constant 0 : index
    %10 = vector.load %arg4[%c0_7, %c0_8] : memref<1x256xf32, #tpu.memory_space<vmem>>, vector<1x256xf32>
    %11 = vector.broadcast %10 : vector<1x256xf32> to vector<128x256xf32>
    %12 = arith.addf %9, %11 : vector<128x256xf32>
    %13 = math.tanh %12 : vector<128x256xf32>
    %c0_9 = arith.constant 0 : index
    %c0_10 = arith.constant 0 : index
    %14 = vector.load %arg5[%c0_9, %c0_10] : memref<256x128xbf16, #tpu.memory_space<vmem>>, vector<256x128xbf16>
    %15 = arith.truncf %13 : vector<128x256xf32> to vector<128x256xbf16>
    %cst_11 = arith.constant dense<0.000000e+00> : vector<128x128xf32>
    %16 = tpu.matmul %15, %14, %cst_11 {dimension_numbers = #tpu.dot_dimension_numbers<[1], [0], [0], [1], [0, 0, 1, 1], [], []>} : vector<128x256xbf16>, vector<256x128xbf16>, vector<128x128xf32> -> vector<128x128xf32>
    %17 = arith.truncf %16 : vector<128x128xf32> to vector<128x128xbf16>
    %cst_12 = arith.constant dense<0.000000e+00> : vector<128x128xf32>
    %18 = tpu.matmul %3, %17, %cst_12 {dimension_numbers = #tpu.dot_dimension_numbers<[1], [0], [0], [1], [0, 0, 1, 1], [], []>} : vector<128x128xbf16>, vector<128x128xbf16>, vector<128x128xf32> -> vector<128x128xf32>
    %c0_13 = arith.constant 0 : index
    %c0_14 = arith.constant 0 : index
    %19 = vector.load %arg6[%c0_13, %c0_14] : memref<1x128xf32, #tpu.memory_space<vmem>>, vector<1x128xf32>
    %20 = vector.broadcast %19 : vector<1x128xf32> to vector<128x128xf32>
    %21 = arith.addf %18, %20 : vector<128x128xf32>
    %22 = math.tanh %21 : vector<128x128xf32>
    %c0_15 = arith.constant 0 : index
    %c0_16 = arith.constant 0 : index
    %23 = vector.load %arg9[%c0_15, %c0_16] : memref<128x128xbf16, #tpu.memory_space<vmem>>, vector<128x128xbf16>
    %24 = arith.mulf %22, %22 : vector<128x128xf32>
    %cst_17 = arith.constant 1.000000e+00 : f32
    %25 = vector.broadcast %cst_17 : f32 to vector<128x128xf32>
    %26 = arith.subf %25, %24 : vector<128x128xf32>
    %27 = arith.extf %23 : vector<128x128xbf16> to vector<128x128xf32>
    %28 = arith.mulf %27, %26 : vector<128x128xf32>
    %29 = arith.truncf %28 : vector<128x128xf32> to vector<128x128xbf16>
    %cst_18 = arith.constant dense<0.000000e+00> : vector<128x128xf32>
    %30 = tpu.matmul %3, %29, %cst_18 {dimension_numbers = #tpu.dot_dimension_numbers<[1], [0], [0], [1], [0, 0, 1, 1], [], []>} : vector<128x128xbf16>, vector<128x128xbf16>, vector<128x128xf32> -> vector<128x128xf32>
    %c0_19 = arith.constant 0 : index
    %c0_20 = arith.constant 0 : index
    %31 = vector.load %arg8[%c0_19, %c0_20] : memref<128x256xbf16, #tpu.memory_space<vmem>>, vector<128x256xbf16>
    %32 = arith.truncf %30 : vector<128x128xf32> to vector<128x128xbf16>
    %cst_21 = arith.constant dense<0.000000e+00> : vector<128x256xf32>
    %33 = tpu.matmul %32, %31, %cst_21 {dimension_numbers = #tpu.dot_dimension_numbers<[1], [0], [0], [1], [0, 0, 1, 1], [], []>} : vector<128x128xbf16>, vector<128x256xbf16>, vector<128x256xf32> -> vector<128x256xf32>
    %34 = arith.mulf %13, %13 : vector<128x256xf32>
    %cst_22 = arith.constant 1.000000e+00 : f32
    %35 = vector.broadcast %cst_22 : f32 to vector<128x256xf32>
    %36 = arith.subf %35, %34 : vector<128x256xf32>
    %37 = arith.mulf %33, %36 : vector<128x256xf32>
    %38 = arith.truncf %37 : vector<128x256xf32> to vector<128x256xbf16>
    %cst_23 = arith.constant dense<0.000000e+00> : vector<128x256xf32>
    %39 = tpu.matmul %3, %38, %cst_23 {dimension_numbers = #tpu.dot_dimension_numbers<[1], [0], [0], [1], [0, 0, 1, 1], [], []>} : vector<128x128xbf16>, vector<128x256xbf16>, vector<128x256xf32> -> vector<128x256xf32>
    %c0_24 = arith.constant 0 : index
    %c0_25 = arith.constant 0 : index
    %40 = vector.load %arg7[%c0_24, %c0_25] : memref<256x256xbf16, #tpu.memory_space<vmem>>, vector<256x256xbf16>
    %41 = arith.truncf %39 : vector<128x256xf32> to vector<128x256xbf16>
    %cst_26 = arith.constant dense<0.000000e+00> : vector<128x256xf32>
    %42 = tpu.matmul %41, %40, %cst_26 {dimension_numbers = #tpu.dot_dimension_numbers<[1], [0], [0], [1], [0, 0, 1, 1], [], []>} : vector<128x256xbf16>, vector<256x256xbf16>, vector<128x256xf32> -> vector<128x256xf32>
    %43 = arith.addf %4, %42 : vector<128x256xf32>
    %c0_27 = arith.constant 0 : index
    %c0_28 = arith.constant 0 : index
    %44 = vector.load %arg11[%c0_27, %c0_28] : memref<128x256xf32, #tpu.memory_space<vmem>>, vector<128x256xf32>
    tpu.vector_store %arg11[%c0_27, %c0_28], %43 {strides = array<i32>} : memref<128x256xf32, #tpu.memory_space<vmem>>, vector<128x256xf32>,
    %c1_i32 = arith.constant 1 : i32
    %45 = arith.cmpi eq, %arg0, %c1_i32 : i32
    %46 = arith.extui %45 : i1 to i32
    %c0_i32_29 = arith.constant 0 : i32
    %47 = arith.cmpi ne, %46, %c0_i32_29 : i32
    scf.if %47 {
      %c0_30 = arith.constant 0 : index
      %c0_31 = arith.constant 0 : index
      %48 = vector.load %arg11[%c0_30, %c0_31] : memref<128x256xf32, #tpu.memory_space<vmem>>, vector<128x128xf32>
      %c0_32 = arith.constant 0 : index
      %c0_33 = arith.constant 0 : index
      %49 = vector.load %arg10[%c0_32, %c0_33] : memref<128x128xf32, #tpu.memory_space<vmem>>, vector<128x128xf32>
      tpu.vector_store %arg10[%c0_32, %c0_33], %48 {strides = array<i32>} : memref<128x128xf32, #tpu.memory_space<vmem>>, vector<128x128xf32>,
    } else {
    }
    return
  }
  func.func @transform_0(%arg0: i32) -> (i32, i32) {
    %c0_i32 = arith.constant 0 : i32
    %c0_i32_0 = arith.constant 0 : i32
    %c0_i32_1 = arith.constant 0 : i32
    return %c0_i32, %c0_i32_0 : i32, i32
  }
  func.func @transform_1(%arg0: i32) -> (i32, i32) {
    %c0_i32 = arith.constant 0 : i32
    %c0_i32_0 = arith.constant 0 : i32
    %c0_i32_1 = arith.constant 0 : i32
    return %c0_i32, %c0_i32_0 : i32, i32
  }
  func.func @transform_2(%arg0: i32) -> (i32, i32) {
    %c0_i32 = arith.constant 0 : i32
    %c0_i32_0 = arith.constant 0 : i32
    %c0_i32_1 = arith.constant 0 : i32
    return %c0_i32, %c0_i32_0 : i32, i32
  }
  func.func @transform_3(%arg0: i32) -> (i32, i32) {
    %c0_i32 = arith.constant 0 : i32
    %c0_i32_0 = arith.constant 0 : i32
    %c0_i32_1 = arith.constant 0 : i32
    return %c0_i32, %c0_i32_0 : i32, i32
  }
  func.func @transform_4(%arg0: i32) -> (i32, i32) {
    %c0_i32 = arith.constant 0 : i32
    %c0_i32_0 = arith.constant 0 : i32
    %c0_i32_1 = arith.constant 0 : i32
    return %c0_i32, %c0_i32_0 : i32, i32
  }
  func.func @transform_5(%arg0: i32) -> (i32, i32) {
    %c0_i32 = arith.constant 0 : i32
    %c0_i32_0 = arith.constant 0 : i32
    %c0_i32_1 = arith.constant 0 : i32
    return %c0_i32, %c0_i32_0 : i32, i32
  }
  func.func @transform_6(%arg0: i32) -> (i32, i32) {
    %c0_i32 = arith.constant 0 : i32
    %c0_i32_0 = arith.constant 0 : i32
    %c0_i32_1 = arith.constant 0 : i32
    return %c0_i32, %c0_i32_0 : i32, i32
  }
  func.func @transform_7(%arg0: i32) -> (i32, i32) {
    %c0_i32 = arith.constant 0 : i32
    %c0_i32_0 = arith.constant 0 : i32
    %c0_i32_1 = arith.constant 0 : i32
    return %c0_i32, %c0_i32_0 : i32, i32
  }
  func.func @transform_8(%arg0: i32) -> (i32, i32) {
    %c0_i32 = arith.constant 0 : i32
    %c0_i32_0 = arith.constant 0 : i32
    %c0_i32_1 = arith.constant 0 : i32
    return %c0_i32, %c0_i32_0 : i32, i32
  }
  func.func @transform_9(%arg0: i32) -> (i32, i32) {
    %c0_i32 = arith.constant 0 : i32
    %c0_i32_0 = arith.constant 0 : i32
    %c0_i32_1 = arith.constant 0 : i32
    return %c0_i32, %c0_i32_0 : i32, i32
  }
}

</mosaic_0001>

<llo_original>
// kernel: tpu_custom_call.1
$region0: #{tpu_custom_call.1}
  #allocation0 [shape = 'u32[]', space=smem, size = 0x4, offset = 0x4, fixed_abs, tag = 'smem constant byte address 0x4 - core index']
  #allocation1 [shape = 'u32[72,128]{1,0:T(1,128)}', space=vmem, size = 0x9000, scoped, tag = 'internal scratch']
  #allocation2 [shape = 'f32[128,256]{1,0:T(8,128)}', space=vmem, size = 0x20000, scoped, tag = 'scratch operand']
  %s0 = inlined_call_operand.hbm [shape: f32[128,256], index: 0, kind: input, shape index: {}]
  %s1 = inlined_call_operand.hbm [shape: bf16[128,128], index: 1, kind: input, shape index: {}]
  %s2 = inlined_call_operand.hbm [shape: bf16[256,256], index: 2, kind: input, shape index: {}]
  %s3 = inlined_call_operand.vmem [shape: f32[1,256], index: 3, kind: input, shape index: {}]
  %s4 = inlined_call_operand.hbm [shape: bf16[256,128], index: 4, kind: input, shape index: {}]
  %s5 = inlined_call_operand.vmem [shape: f32[1,128], index: 5, kind: input, shape index: {}]
  %s6 = inlined_call_operand.hbm [shape: bf16[256,256], index: 6, kind: input, shape index: {}]
  %s7 = inlined_call_operand.hbm [shape: bf16[128,256], index: 7, kind: input, shape index: {}]
  %s8 = inlined_call_operand.hbm [shape: bf16[128,128], index: 8, kind: input, shape index: {}]
  %s9 = inlined_call_operand.hbm [shape: f32[128,128], index: 9, kind: output, shape index: {}]
  %s10 = sld [smem:[#allocation0]]
  $region105: #{tpu_custom_call.1} parent=0
    _
  %s12 = ssub.s32 1, %s10
  %s13 = scalar_select 0, %s12, %s10
  $region1: #{tpu_custom_call.1} parent=0
    #allocation3 [shape = 'u8[131072]{0}', space=vmem, size = 0x20000, scoped, tag = 'input window, operand 0, single buffered']
    #allocation4 [shape = 's32[2]{0}', space=sflag, size = 0x8, scoped, tag = 'scoped memory for tpu_custom_call.1']
    #allocation5 [shape = 's32[2]{0}', space=sflag, size = 0x8, scoped, tag = 'scoped memory for tpu_custom_call.1']
    #allocation6 [shape = 'u8[32768]{0}', space=vmem, size = 0x8000, scoped, tag = 'input window, operand 1, single buffered']
    #allocation7 [shape = 's32[1]{0}', space=sflag, size = 0x4, scoped, tag = 'scoped memory for tpu_custom_call.1']
    #allocation8 [shape = 'u8[131072]{0}', space=vmem, size = 0x20000, scoped, tag = 'input window, operand 2, single buffered']
    #allocation9 [shape = 'u8[65536]{0}', space=vmem, size = 0x10000, scoped, tag = 'input window, operand 4, single buffered']
    #allocation10 [shape = 's32[1]{0}', space=sflag, size = 0x4, scoped, tag = 'scoped memory for tpu_custom_call.1']
    #allocation11 [shape = 'u8[131072]{0}', space=vmem, size = 0x20000, scoped, tag = 'input window, operand 6, single buffered']
    #allocation12 [shape = 'u8[65536]{0}', space=vmem, size = 0x10000, scoped, tag = 'input window, operand 7, single buffered']
    #allocation13 [shape = 's32[1]{0}', space=sflag, size = 0x4, scoped, tag = 'scoped memory for tpu_custom_call.1']
    #allocation14 [shape = 'u8[32768]{0}', space=vmem, size = 0x8000, scoped, tag = 'input window, operand 8, single buffered']
    #allocation15 [shape = 'u8[65536]{0}', space=vmem, size = 0x10000, scoped, tag = 'output window, operand 0, single buffered']
    %14 = vsyncpa [#allocation4], 0
    %15 = vsyncpa [#allocation7], 0
    %16 = vsyncpa [#allocation10], 0
    %17 = vsyncpa [#allocation13], 0
    %18 = vsyncpa [#allocation5], 0
    loop: start=0, step=1, limit=4
    $region2: #{tpu_custom_call.1} parent=1 // loop_pre_header
      _
    $region3: #{tpu_custom_call.1} parent=1 // loop_header
      %s20 = sphi 0, %s24
      %p21 = scmp.ge.s32.totalorder %s20, 4
      %s28 = sphi 0, %s28
      %s30 = sphi 0, %s28
      %s31 = sphi 0, %s30
      %s45 = sphi 0, %s31
      %s49 = sphi 0, %s49
      %s51 = sphi 0, %s49
      %s52 = sphi 0, %s51
      %s66 = sphi 0, %s52
      %s70 = sphi 0, %s70
      %s72 = sphi 0, %s70
      %s73 = sphi 0, %s72
      %s87 = sphi 0, %s73
      %s91 = sphi 0, %s91
      %s93 = sphi 0, %s91
      %s94 = sphi 0, %s93
      %s108 = sphi 0, %s94
      %s112 = sphi 0, %s112
      %s114 = sphi 0, %s112
      %s115 = sphi 0, %s114
      %s129 = sphi 0, %s115
      %s133 = sphi 0, %s133
      %s135 = sphi 0, %s133
      %s136 = sphi 0, %s135
      %s150 = sphi 0, %s136
      %s154 = sphi 0, %s154
      %s156 = sphi 0, %s154
      %s157 = sphi 0, %s156
      %s171 = sphi 0, %s157
      %s175 = sphi 0, %s175
      %s177 = sphi 0, %s175
      %s178 = sphi 0, %s177
      %s192 = sphi 0, %s178
      %s196 = sphi 0, %s196
      %s198 = sphi 0, %s196
      %s199 = sphi 0, %s198
      %s213 = sphi 0, %s199
      %s217 = sphi 0, %s217
      %s219 = sphi 0, %s217
      %s220 = sphi 0, %s219
      %s234 = sphi 0, %s220
    $region4: #{tpu_custom_call.1} parent=1 // loop_header_branch
      %23 = sbr.rel (%p21) target = $region8
    $region5: #{tpu_custom_call.1} parent=1 // loop_body
      %s25 = ssub.s32 %s20, 1
      %s26 = ssub.s32 %s20, 2
      %s27 = sadd.s32 %s20, 1
      %s29 = sadd.s32 %s28, 1
      %p32 = scmp.eq.s32.totalorder %s20, 1
      %p33 = scmp.ne.s32.totalorder %s28, %s30
      %p34 = scmp.eq.s32.totalorder %s20, 0
      %p35 = por %p33, %p34
      %p36 = scmp.ne.s32.totalorder %s28, %s30
      %p37 = scmp.eq.s32.totalorder %s25, 1
      %p38 = por %p36, %p37
      %p39 = scmp.ne.s32.totalorder %s30, %s31
      %p40 = scmp.eq.s32.totalorder %s25, 0
      %p41 = por %p39, %p40
      %p42 = scmp.ne.s32.totalorder %s30, %s31
      %p43 = scmp.eq.s32.totalorder %s26, 1
      %p44 = por %p42, %p43
      %p46 = scmp.ne.s32.totalorder %s31, %s45
      %p47 = scmp.eq.s32.totalorder %s26, 0
      %p48 = por %p46, %p47
      %s50 = sadd.s32 %s49, 1
      %p53 = scmp.eq.s32.totalorder %s20, 1
      %p54 = scmp.ne.s32.totalorder %s49, %s51
      %p55 = scmp.eq.s32.totalorder %s20, 0
      %p56 = por %p54, %p55
      %p57 = scmp.ne.s32.totalorder %s49, %s51
      %p58 = scmp.eq.s32.totalorder %s25, 1
      %p59 = por %p57, %p58
      %p60 = scmp.ne.s32.totalorder %s51, %s52
      %p61 = scmp.eq.s32.totalorder %s25, 0
      %p62 = por %p60, %p61
      %p63 = scmp.ne.s32.totalorder %s51, %s52
      %p64 = scmp.eq.s32.totalorder %s26, 1
      %p65 = por %p63, %p64
      %p67 = scmp.ne.s32.totalorder %s52, %s66
      %p68 = scmp.eq.s32.totalorder %s26, 0
      %p69 = por %p67, %p68
      %s71 = sadd.s32 %s70, 1
      %p74 = scmp.eq.s32.totalorder %s20, 1
      %p75 = scmp.ne.s32.totalorder %s70, %s72
      %p76 = scmp.eq.s32.totalorder %s20, 0
      %p77 = por %p75, %p76
      %p78 = scmp.ne.s32.totalorder %s70, %s72
      %p79 = scmp.eq.s32.totalorder %s25, 1
      %p80 = por %p78, %p79
      %p81 = scmp.ne.s32.totalorder %s72, %s73
      %p82 = scmp.eq.s32.totalorder %s25, 0
      %p83 = por %p81, %p82
      %p84 = scmp.ne.s32.totalorder %s72, %s73
      %p85 = scmp.eq.s32.totalorder %s26, 1
      %p86 = por %p84, %p85
      %p88 = scmp.ne.s32.totalorder %s73, %s87
      %p89 = scmp.eq.s32.totalorder %s26, 0
      %p90 = por %p88, %p89
      %s92 = sadd.s32 %s91, 1
      %p95 = scmp.eq.s32.totalorder %s20, 1
      %p96 = scmp.ne.s32.totalorder %s91, %s93
      %p97 = scmp.eq.s32.totalorder %s20, 0
      %p98 = por %p96, %p97
      %p99 = scmp.ne.s32.totalorder %s91, %s93
      %p100 = scmp.eq.s32.totalorder %s25, 1
      %p101 = por %p99, %p100
      %p102 = scmp.ne.s32.totalorder %s93, %s94
      %p103 = scmp.eq.s32.totalorder %s25, 0
      %p104 = por %p102, %p103
      %p105 = scmp.ne.s32.totalorder %s93, %s94
      %p106 = scmp.eq.s32.totalorder %s26, 1
      %p107 = por %p105, %p106
      %p109 = scmp.ne.s32.totalorder %s94, %s108
      %p110 = scmp.eq.s32.totalorder %s26, 0
      %p111 = por %p109, %p110
      %s113 = sadd.s32 %s112, 1
      %p116 = scmp.eq.s32.totalorder %s20, 1
      %p117 = scmp.ne.s32.totalorder %s112, %s114
      %p118 = scmp.eq.s32.totalorder %s20, 0
      %p119 = por %p117, %p118
      %p120 = scmp.ne.s32.totalorder %s112, %s114
      %p121 = scmp.eq.s32.totalorder %s25, 1
      %p122 = por %p120, %p121
      %p123 = scmp.ne.s32.totalorder %s114, %s115
      %p124 = scmp.eq.s32.totalorder %s25, 0
      %p125 = por %p123, %p124
      %p126 = scmp.ne.s32.totalorder %s114, %s115
      %p127 = scmp.eq.s32.totalorder %s26, 1
      %p128 = por %p126, %p127
      %p130 = scmp.ne.s32.totalorder %s115, %s129
      %p131 = scmp.eq.s32.totalorder %s26, 0
      %p132 = por %p130, %p131
      %s134 = sadd.s32 %s133, 1
      %p137 = scmp.eq.s32.totalorder %s20, 1
      %p138 = scmp.ne.s32.totalorder %s133, %s135
      %p139 = scmp.eq.s32.totalorder %s20, 0
      %p140 = por %p138, %p139
      %p141 = scmp.ne.s32.totalorder %s133, %s135
      %p142 = scmp.eq.s32.totalorder %s25, 1
      %p143 = por %p141, %p142
      %p144 = scmp.ne.s32.totalorder %s135, %s136
      %p145 = scmp.eq.s32.totalorder %s25, 0
      %p146 = por %p144, %p145
      %p147 = scmp.ne.s32.totalorder %s135, %s136
      %p148 = scmp.eq.s32.totalorder %s26, 1
      %p149 = por %p147, %p148
      %p151 = scmp.ne.s32.totalorder %s136, %s150
      %p152 = scmp.eq.s32.totalorder %s26, 0
      %p153 = por %p151, %p152
      %s155 = sadd.s32 %s154, 1
      %p158 = scmp.eq.s32.totalorder %s20, 1
      %p159 = scmp.ne.s32.totalorder %s154, %s156
      %p160 = scmp.eq.s32.totalorder %s20, 0
      %p161 = por %p159, %p160
      %p162 = scmp.ne.s32.totalorder %s154, %s156
      %p163 = scmp.eq.s32.totalorder %s25, 1
      %p164 = por %p162, %p163
      %p165 = scmp.ne.s32.totalorder %s156, %s157
      %p166 = scmp.eq.s32.totalorder %s25, 0
      %p167 = por %p165, %p166
      %p168 = scmp.ne.s32.totalorder %s156, %s157
      %p169 = scmp.eq.s32.totalorder %s26, 1
      %p170 = por %p168, %p169
      %p172 = scmp.ne.s32.totalorder %s157, %s171
      %p173 = scmp.eq.s32.totalorder %s26, 0
      %p174 = por %p172, %p173
      %s176 = sadd.s32 %s175, 1
      %p179 = scmp.eq.s32.totalorder %s20, 1
      %p180 = scmp.ne.s32.totalorder %s175, %s177
      %p181 = scmp.eq.s32.totalorder %s20, 0
      %p182 = por %p180, %p181
      %p183 = scmp.ne.s32.totalorder %s175, %s177
      %p184 = scmp.eq.s32.totalorder %s25, 1
      %p185 = por %p183, %p184
      %p186 = scmp.ne.s32.totalorder %s177, %s178
      %p187 = scmp.eq.s32.totalorder %s25, 0
      %p188 = por %p186, %p187
      %p189 = scmp.ne.s32.totalorder %s177, %s178
      %p190 = scmp.eq.s32.totalorder %s26, 1
      %p191 = por %p189, %p190
      %p193 = scmp.ne.s32.totalorder %s178, %s192
      %p194 = scmp.eq.s32.totalorder %s26, 0
      %p195 = por %p193, %p194
      %s197 = sadd.s32 %s196, 1
      %p200 = scmp.eq.s32.totalorder %s20, 1
      %p201 = scmp.ne.s32.totalorder %s196, %s198
      %p202 = scmp.eq.s32.totalorder %s20, 0
      %p203 = por %p201, %p202
      %p204 = scmp.ne.s32.totalorder %s196, %s198
      %p205 = scmp.eq.s32.totalorder %s25, 1
      %p206 = por %p204, %p205
      %p207 = scmp.ne.s32.totalorder %s198, %s199
      %p208 = scmp.eq.s32.totalorder %s25, 0
      %p209 = por %p207, %p208
      %p210 = scmp.ne.s32.totalorder %s198, %s199
      %p211 = scmp.eq.s32.totalorder %s26, 1
      %p212 = por %p210, %p211
      %p214 = scmp.ne.s32.totalorder %s199, %s213
      %p215 = scmp.eq.s32.totalorder %s26, 0
      %p216 = por %p214, %p215
      %s218 = sadd.s32 %s217, 1
      %p221 = scmp.eq.s32.totalorder %s20, 1
      %p222 = scmp.ne.s32.totalorder %s217, %s219
      %p223 = scmp.eq.s32.totalorder %s20, 0
      %p224 = por %p222, %p223
      %p225 = scmp.ne.s32.totalorder %s217, %s219
      %p226 = scmp.eq.s32.totalorder %s25, 1
      %p227 = por %p225, %p226
      %p228 = scmp.ne.s32.totalorder %s219, %s220
      %p229 = scmp.eq.s32.totalorder %s25, 0
      %p230 = por %p228, %p229
      %p231 = scmp.ne.s32.totalorder %s219, %s220
      %p232 = scmp.eq.s32.totalorder %s26, 1
      %p233 = por %p231, %p232
      %p235 = scmp.ne.s32.totalorder %s220, %s234
      %p236 = scmp.eq.s32.totalorder %s26, 0
      %p237 = por %p235, %p236
      %p238 = scmp.le.s32.totalorder 1, %s20
      %p239 = scmp.lt.s32.totalorder %s20, 3
      %p240 = pnand %p238, %p239
      %p241 = pneg %p240
      // Predicated region
      $region9: #{tpu_custom_call.1} parent=5 // pred_check
        _
      $region10: #{tpu_custom_call.1} parent=5 // pred_check_branch
        %243 = sbr.rel (%p240) target = $region12
      $region11: #{tpu_custom_call.1} parent=5 // pred_region
        %s244 = ssub.s32 %s20, 1
        // Predicated region
        $region13: #{tpu_custom_call.1} parent=11 // pred_check
          %p245 = pneg %p41
        $region14: #{tpu_custom_call.1} parent=11 // pred_check_branch
          %247 = sbr.rel (%p245) target = $region16
        $region15: #{tpu_custom_call.1} parent=11 // pred_region
          %249 = vsyncadd [#allocation4], 0
          %s250 = sshll.u32 %s0, 4
          %s251 = int_to_ptr.hbm [resolvable:$true] %s250
          %s252 = sshll.u32 [#allocation3], 4
          %s253 = int_to_ptr.vmem [resolvable:$true] %s252
          %258 = dma.hbm_to_vmem [thread:$0]  %s251, 4096, %s253, [#allocation4], 256, 256, 16
        $region16: #{tpu_custom_call.1} parent=11 // pred_fallthru
          _
        // Predicated region
        $region17: #{tpu_custom_call.1} parent=11 // pred_check
          %p259 = pneg %p62
        $region18: #{tpu_custom_call.1} parent=11 // pred_check_branch
          %261 = sbr.rel (%p259) target = $region20
        $region19: #{tpu_custom_call.1} parent=11 // pred_region
          %263 = vsyncadd [#allocation7], 0
          %s264 = sshll.u32 %s1, 4
          %s265 = int_to_ptr.hbm [resolvable:$true] %s264
          %s266 = sshll.u32 [#allocation6], 4
          %s267 = int_to_ptr.vmem [resolvable:$true] %s266
          %272 = dma.hbm_to_vmem [thread:$0]  %s265, 1024, %s267, [#allocation7], 64, 64, 4
        $region20: #{tpu_custom_call.1} parent=11 // pred_fallthru
          _
        // Predicated region
        $region21: #{tpu_custom_call.1} parent=11 // pred_check
          %p273 = pneg %p83
        $region22: #{tpu_custom_call.1} parent=11 // pred_check_branch
          %275 = sbr.rel (%p273) target = $region24
        $region23: #{tpu_custom_call.1} parent=11 // pred_region
          %277 = vsyncadd [#allocation7], 0
          %s278 = sshll.u32 %s2, 4
          %s279 = int_to_ptr.hbm [resolvable:$true] %s278
          %s280 = sshll.u32 [#allocation8], 4
          %s281 = int_to_ptr.vmem [resolvable:$true] %s280
          %286 = dma.hbm_to_vmem [thread:$0]  %s279, 4096, %s281, [#allocation7], 128, 128, 8
        $region24: #{tpu_custom_call.1} parent=11 // pred_fallthru
          _
        // Predicated region
        $region25: #{tpu_custom_call.1} parent=11 // pred_check
          %p287 = pneg %p104
        $region26: #{tpu_custom_call.1} parent=11 // pred_check_branch
          %289 = sbr.rel (%p287) target = $region28
        $region27: #{tpu_custom_call.1} parent=11 // pred_region
          _
        $region28: #{tpu_custom_call.1} parent=11 // pred_fallthru
          _
        // Predicated region
        $region29: #{tpu_custom_call.1} parent=11 // pred_check
          %p290 = pneg %p125
        $region30: #{tpu_custom_call.1} parent=11 // pred_check_branch
          %292 = sbr.rel (%p290) target = $region32
        $region31: #{tpu_custom_call.1} parent=11 // pred_region
          %294 = vsyncadd [#allocation10], 0
          %s295 = sshll.u32 %s4, 4
          %s296 = int_to_ptr.hbm [resolvable:$true] %s295
          %s297 = sshll.u32 [#allocation9], 4
          %s298 = int_to_ptr.vmem [resolvable:$true] %s297
          %303 = dma.hbm_to_vmem [thread:$0]  %s296, 2048, %s298, [#allocation10], 64, 64, 4
        $region32: #{tpu_custom_call.1} parent=11 // pred_fallthru
          _
        // Predicated region
        $region33: #{tpu_custom_call.1} parent=11 // pred_check
          %p304 = pneg %p146
        $region34: #{tpu_custom_call.1} parent=11 // pred_check_branch
          %306 = sbr.rel (%p304) target = $region36
        $region35: #{tpu_custom_call.1} parent=11 // pred_region
          _
        $region36: #{tpu_custom_call.1} parent=11 // pred_fallthru
          _
        // Predicated region
        $region37: #{tpu_custom_call.1} parent=11 // pred_check
          %p307 = pneg %p167
        $region38: #{tpu_custom_call.1} parent=11 // pred_check_branch
          %309 = sbr.rel (%p307) target = $region40
        $region39: #{tpu_custom_call.1} parent=11 // pred_region
          %311 = vsyncadd [#allocation10], 0
          %s312 = sshll.u32 %s6, 4
          %s313 = int_to_ptr.hbm [resolvable:$true] %s312
          %s314 = sshll.u32 [#allocation11], 4
          %s315 = int_to_ptr.vmem [resolvable:$true] %s314
          %320 = dma.hbm_to_vmem [thread:$0]  %s313, 4096, %s315, [#allocation10], 128, 128, 8
        $region40: #{tpu_custom_call.1} parent=11 // pred_fallthru
          _
        // Predicated region
        $region41: #{tpu_custom_call.1} parent=11 // pred_check
          %p321 = pneg %p188
        $region42: #{tpu_custom_call.1} parent=11 // pred_check_branch
          %323 = sbr.rel (%p321) target = $region44
        $region43: #{tpu_custom_call.1} parent=11 // pred_region
          %325 = vsyncadd [#allocation13], 0
          %s326 = sshll.u32 %s7, 4
          %s327 = int_to_ptr.hbm [resolvable:$true] %s326
          %s328 = sshll.u32 [#allocation12], 4
          %s329 = int_to_ptr.vmem [resolvable:$true] %s328
          %334 = dma.hbm_to_vmem [thread:$0]  %s327, 2048, %s329, [#allocation13], 128, 128, 8
        $region44: #{tpu_custom_call.1} parent=11 // pred_fallthru
          _
        // Predicated region
        $region45: #{tpu_custom_call.1} parent=11 // pred_check
          %p335 = pneg %p209
        $region46: #{tpu_custom_call.1} parent=11 // pred_check_branch
          %337 = sbr.rel (%p335) target = $region48
        $region47: #{tpu_custom_call.1} parent=11 // pred_region
          %339 = vsyncadd [#allocation13], 0
          %s340 = sshll.u32 %s8, 4
          %s341 = int_to_ptr.hbm [resolvable:$true] %s340
          %s342 = sshll.u32 [#allocation14], 4
          %s343 = int_to_ptr.vmem [resolvable:$true] %s342
          %348 = dma.hbm_to_vmem [thread:$0]  %s341, 1024, %s343, [#allocation13], 64, 64, 4
        $region48: #{tpu_custom_call.1} parent=11 // pred_fallthru
          _
      $region12: #{tpu_custom_call.1} parent=5 // pred_fallthru
        _
      %p349 = scmp.lt.s32.totalorder %s20, 2
      // Predicated region
      $region49: #{tpu_custom_call.1} parent=5 // pred_check
        %p350 = pneg %p349
      $region50: #{tpu_custom_call.1} parent=5 // pred_check_branch
        %352 = sbr.rel (%p350) target = $region52
      $region51: #{tpu_custom_call.1} parent=5 // pred_region
        _
      $region52: #{tpu_custom_call.1} parent=5 // pred_fallthru
        _
      %p353 = scmp.le.s32.totalorder 1, %s20
      %p354 = scmp.lt.s32.totalorder %s20, 3
      %p355 = pnand %p353, %p354
      %p356 = pneg %p355
      // Predicated region
      $region53: #{tpu_custom_call.1} parent=5 // pred_check
        _
      $region54: #{tpu_custom_call.1} parent=5 // pred_check_branch
        %358 = sbr.rel (%p355) target = $region56
      $region55: #{tpu_custom_call.1} parent=5 // pred_region
        %s359 = ssub.s32 %s20, 1
        // Predicated region
        $region57: #{tpu_custom_call.1} parent=55 // pred_check
          %p360 = pneg %p41
        $region58: #{tpu_custom_call.1} parent=55 // pred_check_branch
          %362 = sbr.rel (%p360) target = $region60
        $region59: #{tpu_custom_call.1} parent=55 // pred_region
          %364 = dma.done [#allocation4], 4096
        $region60: #{tpu_custom_call.1} parent=55 // pred_fallthru
          _
        // Predicated region
        $region61: #{tpu_custom_call.1} parent=55 // pred_check
          %p365 = pneg %p62
        $region62: #{tpu_custom_call.1} parent=55 // pred_check_branch
          %367 = sbr.rel (%p365) target = $region64
        $region63: #{tpu_custom_call.1} parent=55 // pred_region
          %369 = dma.done [#allocation7], 1024
        $region64: #{tpu_custom_call.1} parent=55 // pred_fallthru
          _
        // Predicated region
        $region65: #{tpu_custom_call.1} parent=55 // pred_check
          %p370 = pneg %p83
        $region66: #{tpu_custom_call.1} parent=55 // pred_check_branch
          %372 = sbr.rel (%p370) target = $region68
        $region67: #{tpu_custom_call.1} parent=55 // pred_region
          %374 = dma.done [#allocation7], 4096
        $region68: #{tpu_custom_call.1} parent=55 // pred_fallthru
          _
        // Predicated region
        $region69: #{tpu_custom_call.1} parent=55 // pred_check
          %p375 = pneg %p125
        $region70: #{tpu_custom_call.1} parent=55 // pred_check_branch
          %377 = sbr.rel (%p375) target = $region72
        $region71: #{tpu_custom_call.1} parent=55 // pred_region
          %379 = dma.done [#allocation10], 2048
        $region72: #{tpu_custom_call.1} parent=55 // pred_fallthru
          _
        // Predicated region
        $region73: #{tpu_custom_call.1} parent=55 // pred_check
          %p380 = pneg %p167
        $region74: #{tpu_custom_call.1} parent=55 // pred_check_branch
          %382 = sbr.rel (%p380) target = $region76
        $region75: #{tpu_custom_call.1} parent=55 // pred_region
          %384 = dma.done [#allocation10], 4096
        $region76: #{tpu_custom_call.1} parent=55 // pred_fallthru
          _
        // Predicated region
        $region77: #{tpu_custom_call.1} parent=55 // pred_check
          %p385 = pneg %p188
        $region78: #{tpu_custom_call.1} parent=55 // pred_check_branch
          %387 = sbr.rel (%p385) target = $region80
        $region79: #{tpu_custom_call.1} parent=55 // pred_region
          %389 = dma.done [#allocation13], 2048
        $region80: #{tpu_custom_call.1} parent=55 // pred_fallthru
          _
        // Predicated region
        $region81: #{tpu_custom_call.1} parent=55 // pred_check
          %p390 = pneg %p209
        $region82: #{tpu_custom_call.1} parent=55 // pred_check_branch
          %392 = sbr.rel (%p390) target = $region84
        $region83: #{tpu_custom_call.1} parent=55 // pred_region
          %394 = dma.done [#allocation13], 1024
        $region84: #{tpu_custom_call.1} parent=55 // pred_fallthru
          _
        %p395 = pneg %p41
        %p396 = pneg %p38
        %p397 = pneg %p62
        %p398 = pneg %p59
        %p399 = pneg %p83
        %p400 = pneg %p80
        %p401 = pneg %p104
        %p402 = pneg %p101
        %p403 = pneg %p125
        %p404 = pneg %p122
        %p405 = pneg %p146
        %p406 = pneg %p143
        %p407 = pneg %p167
        %p408 = pneg %p164
        %p409 = pneg %p188
        %p410 = pneg %p185
        %p411 = pneg %p209
        %p412 = pneg %p206
        %p413 = pneg %p230
        %p414 = pneg %p227
        %p415 = scmp.eq.s32.totalorder %s25, 0
        // Predicated region
        $region85: #{tpu_custom_call.1} parent=55 // pred_check
          %p416 = pneg %p415
        $region86: #{tpu_custom_call.1} parent=55 // pred_check_branch
          %418 = sbr.rel (%p416) target = $region88
        $region87: #{tpu_custom_call.1} parent=55 // pred_region
          %v419 = vld [vmem:[#allocation3] sm:$0xff]
          %v420 = vld [vmem:[#allocation3 + $0x8] sm:$0xff]
          %v421 = vld [vmem:[#allocation3 + $0x10] sm:$0xff]
          %v422 = vld [vmem:[#allocation3 + $0x18] sm:$0xff]
          %v423 = vld [vmem:[#allocation3 + $0x20] sm:$0xff]
          %v424 = vld [vmem:[#allocation3 + $0x28] sm:$0xff]
          %v425 = vld [vmem:[#allocation3 + $0x30] sm:$0xff]
          %v426 = vld [vmem:[#allocation3 + $0x38] sm:$0xff]
          %v427 = vld [vmem:[#allocation3 + $0x40] sm:$0xff]
          %v428 = vld [vmem:[#allocation3 + $0x48] sm:$0xff]
          %v429 = vld [vmem:[#allocation3 + $0x50] sm:$0xff]
          %v430 = vld [vmem:[#allocation3 + $0x58] sm:$0xff]
          %v431 = vld [vmem:[#allocation3 + $0x60] sm:$0xff]
          %v432 = vld [vmem:[#allocation3 + $0x68] sm:$0xff]
          %v433 = vld [vmem:[#allocation3 + $0x70] sm:$0xff]
          %v434 = vld [vmem:[#allocation3 + $0x78] sm:$0xff]
          %v435 = vld [vmem:[#allocation3 + $0x80] sm:$0xff]
          %v436 = vld [vmem:[#allocation3 + $0x88] sm:$0xff]
          %v437 = vld [vmem:[#allocation3 + $0x90] sm:$0xff]
          %v438 = vld [vmem:[#allocation3 + $0x98] sm:$0xff]
          %v439 = vld [vmem:[#allocation3 + $0xa0] sm:$0xff]
          %v440 = vld [vmem:[#allocation3 + $0xa8] sm:$0xff]
          %v441 = vld [vmem:[#allocation3 + $0xb0] sm:$0xff]
          %v442 = vld [vmem:[#allocation3 + $0xb8] sm:$0xff]
          %v443 = vld [vmem:[#allocation3 + $0xc0] sm:$0xff]
          %v444 = vld [vmem:[#allocation3 + $0xc8] sm:$0xff]
          %v445 = vld [vmem:[#allocation3 + $0xd0] sm:$0xff]
          %v446 = vld [vmem:[#allocation3 + $0xd8] sm:$0xff]
          %v447 = vld [vmem:[#allocation3 + $0xe0] sm:$0xff]
          %v448 = vld [vmem:[#allocation3 + $0xe8] sm:$0xff]
          %v449 = vld [vmem:[#allocation3 + $0xf0] sm:$0xff]
          %v450 = vld [vmem:[#allocation3 + $0xf8] sm:$0xff]
          %451 = vst [vmem:[#allocation2] sm:$0xff] %v419
          %452 = vst [vmem:[#allocation2 + $0x8] sm:$0xff] %v420
          %453 = vst [vmem:[#allocation2 + $0x10] sm:$0xff] %v421
          %454 = vst [vmem:[#allocation2 + $0x18] sm:$0xff] %v422
          %455 = vst [vmem:[#allocation2 + $0x20] sm:$0xff] %v423
          %456 = vst [vmem:[#allocation2 + $0x28] sm:$0xff] %v424
          %457 = vst [vmem:[#allocation2 + $0x30] sm:$0xff] %v425
          %458 = vst [vmem:[#allocation2 + $0x38] sm:$0xff] %v426
          %459 = vst [vmem:[#allocation2 + $0x40] sm:$0xff] %v427
          %460 = vst [vmem:[#allocation2 + $0x48] sm:$0xff] %v428
          %461 = vst [vmem:[#allocation2 + $0x50] sm:$0xff] %v429
          %462 = vst [vmem:[#allocation2 + $0x58] sm:$0xff] %v430
          %463 = vst [vmem:[#allocation2 + $0x60] sm:$0xff] %v431
          %464 = vst [vmem:[#allocation2 + $0x68] sm:$0xff] %v432
          %465 = vst [vmem:[#allocation2 + $0x70] sm:$0xff] %v433
          %466 = vst [vmem:[#allocation2 + $0x78] sm:$0xff] %v434
          %467 = vst [vmem:[#allocation2 + $0x80] sm:$0xff] %v435
          %468 = vst [vmem:[#allocation2 + $0x88] sm:$0xff] %v436
          %469 = vst [vmem:[#allocation2 + $0x90] sm:$0xff] %v437
          %470 = vst [vmem:[#allocation2 + $0x98] sm:$0xff] %v438
          %471 = vst [vmem:[#allocation2 + $0xa0] sm:$0xff] %v439
          %472 = vst [vmem:[#allocation2 + $0xa8] sm:$0xff] %v440
          %473 = vst [vmem:[#allocation2 + $0xb0] sm:$0xff] %v441
          %474 = vst [vmem:[#allocation2 + $0xb8] sm:$0xff] %v442
          %475 = vst [vmem:[#allocation2 + $0xc0] sm:$0xff] %v443
          %476 = vst [vmem:[#allocation2 + $0xc8] sm:$0xff] %v444
          %477 = vst [vmem:[#allocation2 + $0xd0] sm:$0xff] %v445
          %478 = vst [vmem:[#allocation2 + $0xd8] sm:$0xff] %v446
          %479 = vst [vmem:[#allocation2 + $0xe0] sm:$0xff] %v447
          %480 = vst [vmem:[#allocation2 + $0xe8] sm:$0xff] %v448
          %481 = vst [vmem:[#allocation2 + $0xf0] sm:$0xff] %v449
          %482 = vst [vmem:[#allocation2 + $0xf8] sm:$0xff] %v450
        $region88: #{tpu_custom_call.1} parent=55 // pred_fallthru
          _
        %v483 = vld [vmem:[#allocation6] sm:$0xf]
        %v484 = vld [vmem:[#allocation6 + $0x4] sm:$0xf]
        %v485 = vld [vmem:[#allocation6 + $0x8] sm:$0xf]
        %v486 = vld [vmem:[#allocation6 + $0xc] sm:$0xf]
        %v487 = vld [vmem:[#allocation6 + $0x10] sm:$0xf]
        %v488 = vld [vmem:[#allocation6 + $0x14] sm:$0xf]
        %v489 = vld [vmem:[#allocation6 + $0x18] sm:$0xf]
        %v490 = vld [vmem:[#allocation6 + $0x1c] sm:$0xf]
        %v491 = vld [vmem:[#allocation6 + $0x20] sm:$0xf]
        %v492 = vld [vmem:[#allocation6 + $0x24] sm:$0xf]
        %v493 = vld [vmem:[#allocation6 + $0x28] sm:$0xf]
        %v494 = vld [vmem:[#allocation6 + $0x2c] sm:$0xf]
        %v495 = vld [vmem:[#allocation6 + $0x30] sm:$0xf]
        %v496 = vld [vmem:[#allocation6 + $0x34] sm:$0xf]
        %v497 = vld [vmem:[#allocation6 + $0x38] sm:$0xf]
        %v498 = vld [vmem:[#allocation6 + $0x3c] sm:$0xf]
        %v499 = vld [vmem:[#allocation2] sm:$0xff]
        %v500 = vld [vmem:[#allocation2 + $0x8] sm:$0xff]
        %v501 = vld [vmem:[#allocation2 + $0x10] sm:$0xff]
        %v502 = vld [vmem:[#allocation2 + $0x18] sm:$0xff]
        %v503 = vld [vmem:[#allocation2 + $0x20] sm:$0xff]
        %v504 = vld [vmem:[#allocation2 + $0x28] sm:$0xff]
        %v505 = vld [vmem:[#allocation2 + $0x30] sm:$0xff]
        %v506 = vld [vmem:[#allocation2 + $0x38] sm:$0xff]
        %v507 = vld [vmem:[#allocation2 + $0x40] sm:$0xff]
        %v508 = vld [vmem:[#allocation2 + $0x48] sm:$0xff]
        %v509 = vld [vmem:[#allocation2 + $0x50] sm:$0xff]
        %v510 = vld [vmem:[#allocation2 + $0x58] sm:$0xff]
        %v511 = vld [vmem:[#allocation2 + $0x60] sm:$0xff]
        %v512 = vld [vmem:[#allocation2 + $0x68] sm:$0xff]
        %v513 = vld [vmem:[#allocation2 + $0x70] sm:$0xff]
        %v514 = vld [vmem:[#allocation2 + $0x78] sm:$0xff]
        %v515 = vld [vmem:[#allocation2 + $0x80] sm:$0xff]
        %v516 = vld [vmem:[#allocation2 + $0x88] sm:$0xff]
        %v517 = vld [vmem:[#allocation2 + $0x90] sm:$0xff]
        %v518 = vld [vmem:[#allocation2 + $0x98] sm:$0xff]
        %v519 = vld [vmem:[#allocation2 + $0xa0] sm:$0xff]
        %v520 = vld [vmem:[#allocation2 + $0xa8] sm:$0xff]
        %v521 = vld [vmem:[#allocation2 + $0xb0] sm:$0xff]
        %v522 = vld [vmem:[#allocation2 + $0xb8] sm:$0xff]
        %v523 = vld [vmem:[#allocation2 + $0xc0] sm:$0xff]
        %v524 = vld [vmem:[#allocation2 + $0xc8] sm:$0xff]
        %v525 = vld [vmem:[#allocation2 + $0xd0] sm:$0xff]
        %v526 = vld [vmem:[#allocation2 + $0xd8] sm:$0xff]
        %v527 = vld [vmem:[#allocation2 + $0xe0] sm:$0xff]
        %v528 = vld [vmem:[#allocation2 + $0xe8] sm:$0xff]
        %v529 = vld [vmem:[#allocation2 + $0xf0] sm:$0xff]
        %v530 = vld [vmem:[#allocation2 + $0xf8] sm:$0xff]
        %v531 = vld [vmem:[#allocation8] sm:$0xff]
        %v532 = vld [vmem:[#allocation8 + $0x8] sm:$0xff]
        %v533 = vld [vmem:[#allocation8 + $0x10] sm:$0xff]
        %v534 = vld [vmem:[#allocation8 + $0x18] sm:$0xff]
        %v535 = vld [vmem:[#allocation8 + $0x20] sm:$0xff]
        %v536 = vld [vmem:[#allocation8 + $0x28] sm:$0xff]
        %v537 = vld [vmem:[#allocation8 + $0x30] sm:$0xff]
        %v538 = vld [vmem:[#allocation8 + $0x38] sm:$0xff]
        %v539 = vld [vmem:[#allocation8 + $0x40] sm:$0xff]
        %v540 = vld [vmem:[#allocation8 + $0x48] sm:$0xff]
        %v541 = vld [vmem:[#allocation8 + $0x50] sm:$0xff]
        %v542 = vld [vmem:[#allocation8 + $0x58] sm:$0xff]
        %v543 = vld [vmem:[#allocation8 + $0x60] sm:$0xff]
        %v544 = vld [vmem:[#allocation8 + $0x68] sm:$0xff]
        %v545 = vld [vmem:[#allocation8 + $0x70] sm:$0xff]
        %v546 = vld [vmem:[#allocation8 + $0x78] sm:$0xff]
        %v547 = vld [vmem:[#allocation8 + $0x80] sm:$0xff]
        %v548 = vld [vmem:[#allocation8 + $0x88] sm:$0xff]
        %v549 = vld [vmem:[#allocation8 + $0x90] sm:$0xff]
        %v550 = vld [vmem:[#allocation8 + $0x98] sm:$0xff]
        %v551 = vld [vmem:[#allocation8 + $0xa0] sm:$0xff]
        %v552 = vld [vmem:[#allocation8 + $0xa8] sm:$0xff]
        %v553 = vld [vmem:[#allocation8 + $0xb0] sm:$0xff]
        %v554 = vld [vmem:[#allocation8 + $0xb8] sm:$0xff]
        %v555 = vld [vmem:[#allocation8 + $0xc0] sm:$0xff]
        %v556 = vld [vmem:[#allocation8 + $0xc8] sm:$0xff]
        %v557 = vld [vmem:[#allocation8 + $0xd0] sm:$0xff]
        %v558 = vld [vmem:[#allocation8 + $0xd8] sm:$0xff]
        %v559 = vld [vmem:[#allocation8 + $0xe0] sm:$0xff]
        %v560 = vld [vmem:[#allocation8 + $0xe8] sm:$0xff]
        %v561 = vld [vmem:[#allocation8 + $0xf0] sm:$0xff]
        %v562 = vld [vmem:[#allocation8 + $0xf8] sm:$0xff]
        %v563 = vpack.c.bf16 %v501, %v499
        %v564 = vpack.c.bf16 %v502, %v500
        %v565 = vpack.c.bf16 %v505, %v503
        %v566 = vpack.c.bf16 %v506, %v504
        %v567 = vpack.c.bf16 %v509, %v507
        %v568 = vpack.c.bf16 %v510, %v508
        %v569 = vpack.c.bf16 %v513, %v511
        %v570 = vpack.c.bf16 %v514, %v512
        %v571 = vpack.c.bf16 %v517, %v515
        %v572 = vpack.c.bf16 %v518, %v516
        %v573 = vpack.c.bf16 %v521, %v519
        %v574 = vpack.c.bf16 %v522, %v520
        %v575 = vpack.c.bf16 %v525, %v523
        %v576 = vpack.c.bf16 %v526, %v524
        %v577 = vpack.c.bf16 %v529, %v527
        %v578 = vpack.c.bf16 %v530, %v528
        %v611 = vunpack.c.l.b16 %v531
        %v612 = vunpack.c.h.b16 %v531
        %v613 = vunpack.c.l.b16 %v532
        %v614 = vunpack.c.h.b16 %v532
        %v615 = vunpack.c.l.b16 %v533
        %v616 = vunpack.c.h.b16 %v533
        %v617 = vunpack.c.l.b16 %v534
        %v618 = vunpack.c.h.b16 %v534
        %v619 = vunpack.c.l.b16 %v535
        %v620 = vunpack.c.h.b16 %v535
        %v621 = vunpack.c.l.b16 %v536
        %v622 = vunpack.c.h.b16 %v536
        %v623 = vunpack.c.l.b16 %v537
        %v624 = vunpack.c.h.b16 %v537
        %v625 = vunpack.c.l.b16 %v538
        %v626 = vunpack.c.h.b16 %v538
        %v627 = vunpack.c.l.b16 %v539
        %v628 = vunpack.c.h.b16 %v539
        %v629 = vunpack.c.l.b16 %v540
        %v630 = vunpack.c.h.b16 %v540
        %v631 = vunpack.c.l.b16 %v541
        %v632 = vunpack.c.h.b16 %v541
        %v633 = vunpack.c.l.b16 %v542
        %v634 = vunpack.c.h.b16 %v542
        %v635 = vunpack.c.l.b16 %v543
        %v636 = vunpack.c.h.b16 %v543
        %v637 = vunpack.c.l.b16 %v544
        %v638 = vunpack.c.h.b16 %v544
        %v639 = vunpack.c.l.b16 %v545
        %v640 = vunpack.c.h.b16 %v545
        %v641 = vunpack.c.l.b16 %v546
        %v642 = vunpack.c.h.b16 %v546
        %v643 = vunpack.c.l.b16 %v547
        %v644 = vunpack.c.h.b16 %v547
        %v645 = vunpack.c.l.b16 %v548
        %v646 = vunpack.c.h.b16 %v548
        %v647 = vunpack.c.l.b16 %v549
        %v648 = vunpack.c.h.b16 %v549
        %v649 = vunpack.c.l.b16 %v550
        %v650 = vunpack.c.h.b16 %v550
        %v651 = vunpack.c.l.b16 %v551
        %v652 = vunpack.c.h.b16 %v551
        %v653 = vunpack.c.l.b16 %v552
        %v654 = vunpack.c.h.b16 %v552
        %v655 = vunpack.c.l.b16 %v553
        %v656 = vunpack.c.h.b16 %v553
        %v657 = vunpack.c.l.b16 %v554
        %v658 = vunpack.c.h.b16 %v554
        %v659 = vunpack.c.l.b16 %v555
        %v660 = vunpack.c.h.b16 %v555
        %v661 = vunpack.c.l.b16 %v556
        %v662 = vunpack.c.h.b16 %v556
        %v663 = vunpack.c.l.b16 %v557
        %v664 = vunpack.c.h.b16 %v557
        %v665 = vunpack.c.l.b16 %v558
        %v666 = vunpack.c.h.b16 %v558
        %v667 = vunpack.c.l.b16 %v559
        %v668 = vunpack.c.h.b16 %v559
        %v669 = vunpack.c.l.b16 %v560
        %v670 = vunpack.c.h.b16 %v560
        %v671 = vunpack.c.l.b16 %v561
        %v672 = vunpack.c.h.b16 %v561
        %v673 = vunpack.c.l.b16 %v562
        %v674 = vunpack.c.h.b16 %v562
        %v675 = vpack.c.b16 %v613, %v611
        %v676 = vpack.c.b16 %v614, %v612
        %v677 = vpack.c.b16 %v617, %v615
        %v678 = vpack.c.b16 %v618, %v616
        %v679 = vpack.c.b16 %v621, %v619
        %v680 = vpack.c.b16 %v622, %v620
        %v681 = vpack.c.b16 %v625, %v623
        %v682 = vpack.c.b16 %v626, %v624
        %v683 = vpack.c.b16 %v629, %v627
        %v684 = vpack.c.b16 %v630, %v628
        %v685 = vpack.c.b16 %v633, %v631
        %v686 = vpack.c.b16 %v634, %v632
        %v687 = vpack.c.b16 %v637, %v635
        %v688 = vpack.c.b16 %v638, %v636
        %v689 = vpack.c.b16 %v641, %v639
        %v690 = vpack.c.b16 %v642, %v640
        %v691 = vpack.c.b16 %v645, %v643
        %v692 = vpack.c.b16 %v646, %v644
        %v693 = vpack.c.b16 %v649, %v647
        %v694 = vpack.c.b16 %v650, %v648
        %v695 = vpack.c.b16 %v653, %v651
        %v696 = vpack.c.b16 %v654, %v652
        %v697 = vpack.c.b16 %v657, %v655
        %v698 = vpack.c.b16 %v658, %v656
        %v699 = vpack.c.b16 %v661, %v659
        %v700 = vpack.c.b16 %v662, %v660
        %v701 = vpack.c.b16 %v665, %v663
        %v702 = vpack.c.b16 %v666, %v664
        %v703 = vpack.c.b16 %v669, %v667
        %v704 = vpack.c.b16 %v670, %v668
        %v705 = vpack.c.b16 %v673, %v671
        %v706 = vpack.c.b16 %v674, %v672
        %739 = vmatpush.bf16.msra.mxu0 %v689
        %740 = vmatpush.bf16.msra.mxu0 %v687
        %741 = vmatpush.bf16.msra.mxu0 %v685
        %742 = vmatpush.bf16.msra.mxu0 %v683
        %743 = vmatpush.bf16.msra.mxu0 %v681
        %744 = vmatpush.bf16.msra.mxu0 %v679
        %745 = vmatpush.bf16.msra.mxu0 %v677
        %746 = vmatpush.bf16.msra.mxu0 %v675
        %747 = vmatmul.bf16.gmra.mxu0 %v563
        %v748 = vpop.f32.mrf.mxu0
        %v749 = vadd.f32 0.0, %v748
        %v750 = vpop.f32.mrf.mxu0
        %v751 = vadd.f32 0.0, %v750
        %752 = vmatmul.bf16.gmra.mxu0 %v565
        %v753 = vpop.f32.mrf.mxu0
        %v754 = vadd.f32 0.0, %v753
        %v755 = vpop.f32.mrf.mxu0
        %v756 = vadd.f32 0.0, %v755
        %757 = vmatmul.bf16.gmra.mxu0 %v567
        %v758 = vpop.f32.mrf.mxu0
        %v759 = vadd.f32 0.0, %v758
        %v760 = vpop.f32.mrf.mxu0
        %v761 = vadd.f32 0.0, %v760
        %762 = vmatmul.bf16.gmra.mxu0 %v569
        %v763 = vpop.f32.mrf.mxu0
        %v764 = vadd.f32 0.0, %v763
        %v765 = vpop.f32.mrf.mxu0
        %v766 = vadd.f32 0.0, %v765
        %767 = vmatmul.bf16.gmra.mxu0 %v571
        %v768 = vpop.f32.mrf.mxu0
        %v769 = vadd.f32 0.0, %v768
        %v770 = vpop.f32.mrf.mxu0
        %v771 = vadd.f32 0.0, %v770
        %772 = vmatmul.bf16.gmra.mxu0 %v573
        %v773 = vpop.f32.mrf.mxu0
        %v774 = vadd.f32 0.0, %v773
        %v775 = vpop.f32.mrf.mxu0
        %v776 = vadd.f32 0.0, %v775
        %777 = vmatmul.bf16.gmra.mxu0 %v575
        %v778 = vpop.f32.mrf.mxu0
        %v779 = vadd.f32 0.0, %v778
        %v780 = vpop.f32.mrf.mxu0
        %v781 = vadd.f32 0.0, %v780
        %782 = vmatmul.bf16.gmra.mxu0 %v577
        %v783 = vpop.f32.mrf.mxu0
        %v784 = vadd.f32 0.0, %v783
        %v785 = vpop.f32.mrf.mxu0
        %v786 = vadd.f32 0.0, %v785
        %787 = vdwg.mxu0
        %788 = vmatpush.bf16.msra.mxu0 %v705
        %789 = vmatpush.bf16.msra.mxu0 %v703
        %790 = vmatpush.bf16.msra.mxu0 %v701
        %791 = vmatpush.bf16.msra.mxu0 %v699
        %792 = vmatpush.bf16.msra.mxu0 %v697
        %793 = vmatpush.bf16.msra.mxu0 %v695
        %794 = vmatpush.bf16.msra.mxu0 %v693
        %795 = vmatpush.bf16.msra.mxu0 %v691
        %796 = vmatmul.bf16.gmra.mxu0 %v564
        %v797 = vpop.f32.mrf.mxu0
        %v798 = vadd.f32 %v749, %v797
        %v799 = vpop.f32.mrf.mxu0
        %v800 = vadd.f32 %v751, %v799
        %801 = vmatmul.bf16.gmra.mxu0 %v566
        %v802 = vpop.f32.mrf.mxu0
        %v803 = vadd.f32 %v754, %v802
        %v804 = vpop.f32.mrf.mxu0
        %v805 = vadd.f32 %v756, %v804
        %806 = vmatmul.bf16.gmra.mxu0 %v568
        %v807 = vpop.f32.mrf.mxu0
        %v808 = vadd.f32 %v759, %v807
        %v809 = vpop.f32.mrf.mxu0
        %v810 = vadd.f32 %v761, %v809
        %811 = vmatmul.bf16.gmra.mxu0 %v570
        %v812 = vpop.f32.mrf.mxu0
        %v813 = vadd.f32 %v764, %v812
        %v814 = vpop.f32.mrf.mxu0
        %v815 = vadd.f32 %v766, %v814
        %816 = vmatmul.bf16.gmra.mxu0 %v572
        %v817 = vpop.f32.mrf.mxu0
        %v818 = vadd.f32 %v769, %v817
        %v819 = vpop.f32.mrf.mxu0
        %v820 = vadd.f32 %v771, %v819
        %821 = vmatmul.bf16.gmra.mxu0 %v574
        %v822 = vpop.f32.mrf.mxu0
        %v823 = vadd.f32 %v774, %v822
        %v824 = vpop.f32.mrf.mxu0
        %v825 = vadd.f32 %v776, %v824
        %826 = vmatmul.bf16.gmra.mxu0 %v576
        %v827 = vpop.f32.mrf.mxu0
        %v828 = vadd.f32 %v779, %v827
        %v829 = vpop.f32.mrf.mxu0
        %v830 = vadd.f32 %v781, %v829
        %831 = vmatmul.bf16.gmra.mxu0 %v578
        %v832 = vpop.f32.mrf.mxu0
        %v833 = vadd.f32 %v784, %v832
        %v834 = vpop.f32.mrf.mxu0
        %v835 = vadd.f32 %v786, %v834
        %836 = vdwg.mxu0
        %837 = vmatpush.bf16.msra.mxu0 %v690
        %838 = vmatpush.bf16.msra.mxu0 %v688
        %839 = vmatpush.bf16.msra.mxu0 %v686
        %840 = vmatpush.bf16.msra.mxu0 %v684
        %841 = vmatpush.bf16.msra.mxu0 %v682
        %842 = vmatpush.bf16.msra.mxu0 %v680
        %843 = vmatpush.bf16.msra.mxu0 %v678
        %844 = vmatpush.bf16.msra.mxu0 %v676
        %845 = vmatmul.bf16.gmra.mxu0 %v563
        %v846 = vpop.f32.mrf.mxu0
        %v847 = vadd.f32 0.0, %v846
        %v848 = vpop.f32.mrf.mxu0
        %v849 = vadd.f32 0.0, %v848
        %850 = vmatmul.bf16.gmra.mxu0 %v565
        %v851 = vpop.f32.mrf.mxu0
        %v852 = vadd.f32 0.0, %v851
        %v853 = vpop.f32.mrf.mxu0
        %v854 = vadd.f32 0.0, %v853
        %855 = vmatmul.bf16.gmra.mxu0 %v567
        %v856 = vpop.f32.mrf.mxu0
        %v857 = vadd.f32 0.0, %v856
        %v858 = vpop.f32.mrf.mxu0
        %v859 = vadd.f32 0.0, %v858
        %860 = vmatmul.bf16.gmra.mxu0 %v569
        %v861 = vpop.f32.mrf.mxu0
        %v862 = vadd.f32 0.0, %v861
        %v863 = vpop.f32.mrf.mxu0
        %v864 = vadd.f32 0.0, %v863
        %865 = vmatmul.bf16.gmra.mxu0 %v571
        %v866 = vpop.f32.mrf.mxu0
        %v867 = vadd.f32 0.0, %v866
        %v868 = vpop.f32.mrf.mxu0
        %v869 = vadd.f32 0.0, %v868
        %870 = vmatmul.bf16.gmra.mxu0 %v573
        %v871 = vpop.f32.mrf.mxu0
        %v872 = vadd.f32 0.0, %v871
        %v873 = vpop.f32.mrf.mxu0
        %v874 = vadd.f32 0.0, %v873
        %875 = vmatmul.bf16.gmra.mxu0 %v575
        %v876 = vpop.f32.mrf.mxu0
        %v877 = vadd.f32 0.0, %v876
        %v878 = vpop.f32.mrf.mxu0
        %v879 = vadd.f32 0.0, %v878
        %880 = vmatmul.bf16.gmra.mxu0 %v577
        %v881 = vpop.f32.mrf.mxu0
        %v882 = vadd.f32 0.0, %v881
        %v883 = vpop.f32.mrf.mxu0
        %v884 = vadd.f32 0.0, %v883
        %885 = vdwg.mxu0
        %886 = vmatpush.bf16.msra.mxu0 %v706
        %887 = vmatpush.bf16.msra.mxu0 %v704
        %888 = vmatpush.bf16.msra.mxu0 %v702
        %889 = vmatpush.bf16.msra.mxu0 %v700
        %890 = vmatpush.bf16.msra.mxu0 %v698
        %891 = vmatpush.bf16.msra.mxu0 %v696
        %892 = vmatpush.bf16.msra.mxu0 %v694
        %893 = vmatpush.bf16.msra.mxu0 %v692
        %894 = vmatmul.bf16.gmra.mxu0 %v564
        %v895 = vpop.f32.mrf.mxu0
        %v896 = vadd.f32 %v847, %v895
        %v897 = vpop.f32.mrf.mxu0
        %v898 = vadd.f32 %v849, %v897
        %899 = vmatmul.bf16.gmra.mxu0 %v566
        %v900 = vpop.f32.mrf.mxu0
        %v901 = vadd.f32 %v852, %v900
        %v902 = vpop.f32.mrf.mxu0
        %v903 = vadd.f32 %v854, %v902
        %904 = vmatmul.bf16.gmra.mxu0 %v568
        %v905 = vpop.f32.mrf.mxu0
        %v906 = vadd.f32 %v857, %v905
        %v907 = vpop.f32.mrf.mxu0
        %v908 = vadd.f32 %v859, %v907
        %909 = vmatmul.bf16.gmra.mxu0 %v570
        %v910 = vpop.f32.mrf.mxu0
        %v911 = vadd.f32 %v862, %v910
        %v912 = vpop.f32.mrf.mxu0
        %v913 = vadd.f32 %v864, %v912
        %914 = vmatmul.bf16.gmra.mxu0 %v572
        %v915 = vpop.f32.mrf.mxu0
        %v916 = vadd.f32 %v867, %v915
        %v917 = vpop.f32.mrf.mxu0
        %v918 = vadd.f32 %v869, %v917
        %919 = vmatmul.bf16.gmra.mxu0 %v574
        %v920 = vpop.f32.mrf.mxu0
        %v921 = vadd.f32 %v872, %v920
        %v922 = vpop.f32.mrf.mxu0
        %v923 = vadd.f32 %v874, %v922
        %924 = vmatmul.bf16.gmra.mxu0 %v576
        %v925 = vpop.f32.mrf.mxu0
        %v926 = vadd.f32 %v877, %v925
        %v927 = vpop.f32.mrf.mxu0
        %v928 = vadd.f32 %v879, %v927
        %929 = vmatmul.bf16.gmra.mxu0 %v578
        %v930 = vpop.f32.mrf.mxu0
        %v931 = vadd.f32 %v882, %v930
        %v932 = vpop.f32.mrf.mxu0
        %v933 = vadd.f32 %v884, %v932
        %934 = vdwg.mxu0
        %v935 = vpack.c.bf16 %v800, %v798
        %v936 = vpack.c.bf16 %v898, %v896
        %v937 = vpack.c.bf16 %v805, %v803
        %v938 = vpack.c.bf16 %v903, %v901
        %v939 = vpack.c.bf16 %v810, %v808
        %v940 = vpack.c.bf16 %v908, %v906
        %v941 = vpack.c.bf16 %v815, %v813
        %v942 = vpack.c.bf16 %v913, %v911
        %v943 = vpack.c.bf16 %v820, %v818
        %v944 = vpack.c.bf16 %v918, %v916
        %v945 = vpack.c.bf16 %v825, %v823
        %v946 = vpack.c.bf16 %v923, %v921
        %v947 = vpack.c.bf16 %v830, %v828
        %v948 = vpack.c.bf16 %v928, %v926
        %v949 = vpack.c.bf16 %v835, %v833
        %v950 = vpack.c.bf16 %v933, %v931
        %v951 = vld [vmem:[%s3] sm:$0x3]
        %v953 = vperm.slane %v951, 0
        %v954 = vperm.slane %v951, 1
        %v973 = vunpack.c.l.b16 %v483
        %v974 = vunpack.c.l.b16 %v484
        %v975 = vunpack.c.l.b16 %v485
        %v976 = vunpack.c.l.b16 %v486
        %v977 = vunpack.c.l.b16 %v487
        %v978 = vunpack.c.l.b16 %v488
        %v979 = vunpack.c.l.b16 %v489
        %v980 = vunpack.c.l.b16 %v490
        %v981 = vunpack.c.l.b16 %v491
        %v982 = vunpack.c.l.b16 %v492
        %v983 = vunpack.c.l.b16 %v493
        %v984 = vunpack.c.l.b16 %v494
        %v985 = vunpack.c.l.b16 %v495
        %v986 = vunpack.c.l.b16 %v496
        %v987 = vunpack.c.l.b16 %v497
        %v988 = vunpack.c.l.b16 %v498
        %v989 = vpack.c.b16 %v974, %v973
        %v990 = vpack.c.b16 %v976, %v975
        %v991 = vpack.c.b16 %v978, %v977
        %v992 = vpack.c.b16 %v980, %v979
        %v993 = vpack.c.b16 %v982, %v981
        %v994 = vpack.c.b16 %v984, %v983
        %v995 = vpack.c.b16 %v986, %v985
        %v996 = vpack.c.b16 %v988, %v987
        %1005 = vmatpush.bf16.msra.mxu0 %v949
        %1006 = vmatpush.bf16.msra.mxu0 %v947
        %1007 = vmatpush.bf16.msra.mxu0 %v945
        %1008 = vmatpush.bf16.msra.mxu0 %v943
        %1009 = vmatpush.bf16.msra.mxu0 %v941
        %1010 = vmatpush.bf16.msra.mxu0 %v939
        %1011 = vmatpush.bf16.msra.mxu0 %v937
        %1012 = vmatpush.bf16.msra.mxu0 %v935
        %1013 = vmatmul.bf16.gmra.mxu0 %v989
        %v1014 = vpop.f32.mrf.mxu0
        %v1015 = vadd.f32 %v953, %v1014
        %v1016 = vpop.f32.mrf.mxu0
        %v1017 = vadd.f32 %v953, %v1016
        %1018 = vmatmul.bf16.gmra.mxu0 %v990
        %v1019 = vpop.f32.mrf.mxu0
        %v1020 = vadd.f32 %v953, %v1019
        %v1021 = vpop.f32.mrf.mxu0
        %v1022 = vadd.f32 %v953, %v1021
        %1023 = vmatmul.bf16.gmra.mxu0 %v991
        %v1024 = vpop.f32.mrf.mxu0
        %v1025 = vadd.f32 %v953, %v1024
        %v1026 = vpop.f32.mrf.mxu0
        %v1027 = vadd.f32 %v953, %v1026
        %1028 = vmatmul.bf16.gmra.mxu0 %v992
        %v1029 = vpop.f32.mrf.mxu0
        %v1030 = vadd.f32 %v953, %v1029
        %v1031 = vpop.f32.mrf.mxu0
        %v1032 = vadd.f32 %v953, %v1031
        %1033 = vmatmul.bf16.gmra.mxu0 %v993
        %v1034 = vpop.f32.mrf.mxu0
        %v1035 = vadd.f32 %v953, %v1034
        %v1036 = vpop.f32.mrf.mxu0
        %v1037 = vadd.f32 %v953, %v1036
        %1038 = vmatmul.bf16.gmra.mxu0 %v994
        %v1039 = vpop.f32.mrf.mxu0
        %v1040 = vadd.f32 %v953, %v1039
        %v1041 = vpop.f32.mrf.mxu0
        %v1042 = vadd.f32 %v953, %v1041
        %1043 = vmatmul.bf16.gmra.mxu0 %v995
        %v1044 = vpop.f32.mrf.mxu0
        %v1045 = vadd.f32 %v953, %v1044
        %v1046 = vpop.f32.mrf.mxu0
        %v1047 = vadd.f32 %v953, %v1046
        %1048 = vmatmul.bf16.gmra.mxu0 %v996
        %v1049 = vpop.f32.mrf.mxu0
        %v1050 = vadd.f32 %v953, %v1049
        %v1051 = vpop.f32.mrf.mxu0
        %v1052 = vadd.f32 %v953, %v1051
        %1053 = vdwg.mxu0
        %1054 = vmatpush.bf16.msra.mxu0 %v950
        %1055 = vmatpush.bf16.msra.mxu0 %v948
        %1056 = vmatpush.bf16.msra.mxu0 %v946
        %1057 = vmatpush.bf16.msra.mxu0 %v944
        %1058 = vmatpush.bf16.msra.mxu0 %v942
        %1059 = vmatpush.bf16.msra.mxu0 %v940
        %1060 = vmatpush.bf16.msra.mxu0 %v938
        %1061 = vmatpush.bf16.msra.mxu0 %v936
        %1062 = vmatmul.bf16.gmra.mxu0 %v989
        %v1063 = vpop.f32.mrf.mxu0
        %v1064 = vadd.f32 %v954, %v1063
        %v1065 = vpop.f32.mrf.mxu0
        %v1066 = vadd.f32 %v954, %v1065
        %1067 = vmatmul.bf16.gmra.mxu0 %v990
        %v1068 = vpop.f32.mrf.mxu0
        %v1069 = vadd.f32 %v954, %v1068
        %v1070 = vpop.f32.mrf.mxu0
        %v1071 = vadd.f32 %v954, %v1070
        %1072 = vmatmul.bf16.gmra.mxu0 %v991
        %v1073 = vpop.f32.mrf.mxu0
        %v1074 = vadd.f32 %v954, %v1073
        %v1075 = vpop.f32.mrf.mxu0
        %v1076 = vadd.f32 %v954, %v1075
        %1077 = vmatmul.bf16.gmra.mxu0 %v992
        %v1078 = vpop.f32.mrf.mxu0
        %v1079 = vadd.f32 %v954, %v1078
        %v1080 = vpop.f32.mrf.mxu0
        %v1081 = vadd.f32 %v954, %v1080
        %1082 = vmatmul.bf16.gmra.mxu0 %v993
        %v1083 = vpop.f32.mrf.mxu0
        %v1084 = vadd.f32 %v954, %v1083
        %v1085 = vpop.f32.mrf.mxu0
        %v1086 = vadd.f32 %v954, %v1085
        %1087 = vmatmul.bf16.gmra.mxu0 %v994
        %v1088 = vpop.f32.mrf.mxu0
        %v1089 = vadd.f32 %v954, %v1088
        %v1090 = vpop.f32.mrf.mxu0
        %v1091 = vadd.f32 %v954, %v1090
        %1092 = vmatmul.bf16.gmra.mxu0 %v995
        %v1093 = vpop.f32.mrf.mxu0
        %v1094 = vadd.f32 %v954, %v1093
        %v1095 = vpop.f32.mrf.mxu0
        %v1096 = vadd.f32 %v954, %v1095
        %1097 = vmatmul.bf16.gmra.mxu0 %v996
        %v1098 = vpop.f32.mrf.mxu0
        %v1099 = vadd.f32 %v954, %v1098
        %v1100 = vpop.f32.mrf.mxu0
        %v1101 = vadd.f32 %v954, %v1100
        %1102 = vdwg.mxu0
        %v1103 = vtanh.pop %v1015
        %v1104 = vtanh.pop %v1064
        %v1105 = vtanh.pop %v1017
        %v1106 = vtanh.pop %v1066
        %v1107 = vtanh.pop %v1020
        %v1108 = vtanh.pop %v1069
        %v1109 = vtanh.pop %v1022
        %v1110 = vtanh.pop %v1071
        %v1111 = vtanh.pop %v1025
        %v1112 = vtanh.pop %v1074
        %v1113 = vtanh.pop %v1027
        %v1114 = vtanh.pop %v1076
        %v1115 = vtanh.pop %v1030
        %v1116 = vtanh.pop %v1079
        %v1117 = vtanh.pop %v1032
        %v1118 = vtanh.pop %v1081
        %v1119 = vtanh.pop %v1035
        %v1120 = vtanh.pop %v1084
        %v1121 = vtanh.pop %v1037
        %v1122 = vtanh.pop %v1086
        %v1123 = vtanh.pop %v1040
        %v1124 = vtanh.pop %v1089
        %v1125 = vtanh.pop %v1042
        %v1126 = vtanh.pop %v1091
        %v1127 = vtanh.pop %v1045
        %v1128 = vtanh.pop %v1094
        %v1129 = vtanh.pop %v1047
        %v1130 = vtanh.pop %v1096
        %v1131 = vtanh.pop %v1050
        %v1132 = vtanh.pop %v1099
        %v1133 = vtanh.pop %v1052
        %v1134 = vtanh.pop %v1101
        %v1135 = vld [vmem:[#allocation9] sm:$0xf]
        %v1136 = vld [vmem:[#allocation9 + $0x4] sm:$0xf]
        %v1137 = vld [vmem:[#allocation9 + $0x8] sm:$0xf]
        %v1138 = vld [vmem:[#allocation9 + $0xc] sm:$0xf]
        %v1139 = vld [vmem:[#allocation9 + $0x10] sm:$0xf]
        %v1140 = vld [vmem:[#allocation9 + $0x14] sm:$0xf]
        %v1141 = vld [vmem:[#allocation9 + $0x18] sm:$0xf]
        %v1142 = vld [vmem:[#allocation9 + $0x1c] sm:$0xf]
        %v1143 = vld [vmem:[#allocation9 + $0x20] sm:$0xf]
        %v1144 = vld [vmem:[#allocation9 + $0x24] sm:$0xf]
        %v1145 = vld [vmem:[#allocation9 + $0x28] sm:$0xf]
        %v1146 = vld [vmem:[#allocation9 + $0x2c] sm:$0xf]
        %v1147 = vld [vmem:[#allocation9 + $0x30] sm:$0xf]
        %v1148 = vld [vmem:[#allocation9 + $0x34] sm:$0xf]
        %v1149 = vld [vmem:[#allocation9 + $0x38] sm:$0xf]
        %v1150 = vld [vmem:[#allocation9 + $0x3c] sm:$0xf]
        %v1151 = vld [vmem:[#allocation9 + $0x40] sm:$0xf]
        %v1152 = vld [vmem:[#allocation9 + $0x44] sm:$0xf]
        %v1153 = vld [vmem:[#allocation9 + $0x48] sm:$0xf]
        %v1154 = vld [vmem:[#allocation9 + $0x4c] sm:$0xf]
        %v1155 = vld [vmem:[#allocation9 + $0x50] sm:$0xf]
        %v1156 = vld [vmem:[#allocation9 + $0x54] sm:$0xf]
        %v1157 = vld [vmem:[#allocation9 + $0x58] sm:$0xf]
        %v1158 = vld [vmem:[#allocation9 + $0x5c] sm:$0xf]
        %v1159 = vld [vmem:[#allocation9 + $0x60] sm:$0xf]
        %v1160 = vld [vmem:[#allocation9 + $0x64] sm:$0xf]
        %v1161 = vld [vmem:[#allocation9 + $0x68] sm:$0xf]
        %v1162 = vld [vmem:[#allocation9 + $0x6c] sm:$0xf]
        %v1163 = vld [vmem:[#allocation9 + $0x70] sm:$0xf]
        %v1164 = vld [vmem:[#allocation9 + $0x74] sm:$0xf]
        %v1165 = vld [vmem:[#allocation9 + $0x78] sm:$0xf]
        %v1166 = vld [vmem:[#allocation9 + $0x7c] sm:$0xf]
        %v1167 = vpack.c.bf16 %v1105, %v1103
        %v1168 = vpack.c.bf16 %v1106, %v1104
        %v1169 = vpack.c.bf16 %v1109, %v1107
        %v1170 = vpack.c.bf16 %v1110, %v1108
        %v1171 = vpack.c.bf16 %v1113, %v1111
        %v1172 = vpack.c.bf16 %v1114, %v1112
        %v1173 = vpack.c.bf16 %v1117, %v1115
        %v1174 = vpack.c.bf16 %v1118, %v1116
        %v1175 = vpack.c.bf16 %v1121, %v1119
        %v1176 = vpack.c.bf16 %v1122, %v1120
        %v1177 = vpack.c.bf16 %v1125, %v1123
        %v1178 = vpack.c.bf16 %v1126, %v1124
        %v1179 = vpack.c.bf16 %v1129, %v1127
        %v1180 = vpack.c.bf16 %v1130, %v1128
        %v1181 = vpack.c.bf16 %v1133, %v1131
        %v1182 = vpack.c.bf16 %v1134, %v1132
        %v1215 = vunpack.c.l.b16 %v1135
        %v1216 = vunpack.c.l.b16 %v1136
        %v1217 = vunpack.c.l.b16 %v1137
        %v1218 = vunpack.c.l.b16 %v1138
        %v1219 = vunpack.c.l.b16 %v1139
        %v1220 = vunpack.c.l.b16 %v1140
        %v1221 = vunpack.c.l.b16 %v1141
        %v1222 = vunpack.c.l.b16 %v1142
        %v1223 = vunpack.c.l.b16 %v1143
        %v1224 = vunpack.c.l.b16 %v1144
        %v1225 = vunpack.c.l.b16 %v1145
        %v1226 = vunpack.c.l.b16 %v1146
        %v1227 = vunpack.c.l.b16 %v1147
        %v1228 = vunpack.c.l.b16 %v1148
        %v1229 = vunpack.c.l.b16 %v1149
        %v1230 = vunpack.c.l.b16 %v1150
        %v1231 = vunpack.c.l.b16 %v1151
        %v1232 = vunpack.c.l.b16 %v1152
        %v1233 = vunpack.c.l.b16 %v1153
        %v1234 = vunpack.c.l.b16 %v1154
        %v1235 = vunpack.c.l.b16 %v1155
        %v1236 = vunpack.c.l.b16 %v1156
        %v1237 = vunpack.c.l.b16 %v1157
        %v1238 = vunpack.c.l.b16 %v1158
        %v1239 = vunpack.c.l.b16 %v1159
        %v1240 = vunpack.c.l.b16 %v1160
        %v1241 = vunpack.c.l.b16 %v1161
        %v1242 = vunpack.c.l.b16 %v1162
        %v1243 = vunpack.c.l.b16 %v1163
        %v1244 = vunpack.c.l.b16 %v1164
        %v1245 = vunpack.c.l.b16 %v1165
        %v1246 = vunpack.c.l.b16 %v1166
        %v1247 = vpack.c.b16 %v1216, %v1215
        %v1248 = vpack.c.b16 %v1218, %v1217
        %v1249 = vpack.c.b16 %v1220, %v1219
        %v1250 = vpack.c.b16 %v1222, %v1221
        %v1251 = vpack.c.b16 %v1224, %v1223
        %v1252 = vpack.c.b16 %v1226, %v1225
        %v1253 = vpack.c.b16 %v1228, %v1227
        %v1254 = vpack.c.b16 %v1230, %v1229
        %v1255 = vpack.c.b16 %v1232, %v1231
        %v1256 = vpack.c.b16 %v1234, %v1233
        %v1257 = vpack.c.b16 %v1236, %v1235
        %v1258 = vpack.c.b16 %v1238, %v1237
        %v1259 = vpack.c.b16 %v1240, %v1239
        %v1260 = vpack.c.b16 %v1242, %v1241
        %v1261 = vpack.c.b16 %v1244, %v1243
        %v1262 = vpack.c.b16 %v1246, %v1245
        %1279 = vmatpush.bf16.msra.mxu0 %v1254
        %1280 = vmatpush.bf16.msra.mxu0 %v1253
        %1281 = vmatpush.bf16.msra.mxu0 %v1252
        %1282 = vmatpush.bf16.msra.mxu0 %v1251
        %1283 = vmatpush.bf16.msra.mxu0 %v1250
        %1284 = vmatpush.bf16.msra.mxu0 %v1249
        %1285 = vmatpush.bf16.msra.mxu0 %v1248
        %1286 = vmatpush.bf16.msra.mxu0 %v1247
        %1287 = vmatmul.bf16.gmra.mxu0 %v1167
        %v1288 = vpop.f32.mrf.mxu0
        %v1289 = vadd.f32 0.0, %v1288
        %v1290 = vpop.f32.mrf.mxu0
        %v1291 = vadd.f32 0.0, %v1290
        %1292 = vmatmul.bf16.gmra.mxu0 %v1169
        %v1293 = vpop.f32.mrf.mxu0
        %v1294 = vadd.f32 0.0, %v1293
        %v1295 = vpop.f32.mrf.mxu0
        %v1296 = vadd.f32 0.0, %v1295
        %1297 = vmatmul.bf16.gmra.mxu0 %v1171
        %v1298 = vpop.f32.mrf.mxu0
        %v1299 = vadd.f32 0.0, %v1298
        %v1300 = vpop.f32.mrf.mxu0
        %v1301 = vadd.f32 0.0, %v1300
        %1302 = vmatmul.bf16.gmra.mxu0 %v1173
        %v1303 = vpop.f32.mrf.mxu0
        %v1304 = vadd.f32 0.0, %v1303
        %v1305 = vpop.f32.mrf.mxu0
        %v1306 = vadd.f32 0.0, %v1305
        %1307 = vmatmul.bf16.gmra.mxu0 %v1175
        %v1308 = vpop.f32.mrf.mxu0
        %v1309 = vadd.f32 0.0, %v1308
        %v1310 = vpop.f32.mrf.mxu0
        %v1311 = vadd.f32 0.0, %v1310
        %1312 = vmatmul.bf16.gmra.mxu0 %v1177
        %v1313 = vpop.f32.mrf.mxu0
        %v1314 = vadd.f32 0.0, %v1313
        %v1315 = vpop.f32.mrf.mxu0
        %v1316 = vadd.f32 0.0, %v1315
        %1317 = vmatmul.bf16.gmra.mxu0 %v1179
        %v1318 = vpop.f32.mrf.mxu0
        %v1319 = vadd.f32 0.0, %v1318
        %v1320 = vpop.f32.mrf.mxu0
        %v1321 = vadd.f32 0.0, %v1320
        %1322 = vmatmul.bf16.gmra.mxu0 %v1181
        %v1323 = vpop.f32.mrf.mxu0
        %v1324 = vadd.f32 0.0, %v1323
        %v1325 = vpop.f32.mrf.mxu0
        %v1326 = vadd.f32 0.0, %v1325
        %1327 = vdwg.mxu0
        %1328 = vmatpush.bf16.msra.mxu0 %v1262
        %1329 = vmatpush.bf16.msra.mxu0 %v1261
        %1330 = vmatpush.bf16.msra.mxu0 %v1260
        %1331 = vmatpush.bf16.msra.mxu0 %v1259
        %1332 = vmatpush.bf16.msra.mxu0 %v1258
        %1333 = vmatpush.bf16.msra.mxu0 %v1257
        %1334 = vmatpush.bf16.msra.mxu0 %v1256
        %1335 = vmatpush.bf16.msra.mxu0 %v1255
        %1336 = vmatmul.bf16.gmra.mxu0 %v1168
        %v1337 = vpop.f32.mrf.mxu0
        %v1338 = vadd.f32 %v1289, %v1337
        %v1339 = vpop.f32.mrf.mxu0
        %v1340 = vadd.f32 %v1291, %v1339
        %1341 = vmatmul.bf16.gmra.mxu0 %v1170
        %v1342 = vpop.f32.mrf.mxu0
        %v1343 = vadd.f32 %v1294, %v1342
        %v1344 = vpop.f32.mrf.mxu0
        %v1345 = vadd.f32 %v1296, %v1344
        %1346 = vmatmul.bf16.gmra.mxu0 %v1172
        %v1347 = vpop.f32.mrf.mxu0
        %v1348 = vadd.f32 %v1299, %v1347
        %v1349 = vpop.f32.mrf.mxu0
        %v1350 = vadd.f32 %v1301, %v1349
        %1351 = vmatmul.bf16.gmra.mxu0 %v1174
        %v1352 = vpop.f32.mrf.mxu0
        %v1353 = vadd.f32 %v1304, %v1352
        %v1354 = vpop.f32.mrf.mxu0
        %v1355 = vadd.f32 %v1306, %v1354
        %1356 = vmatmul.bf16.gmra.mxu0 %v1176
        %v1357 = vpop.f32.mrf.mxu0
        %v1358 = vadd.f32 %v1309, %v1357
        %v1359 = vpop.f32.mrf.mxu0
        %v1360 = vadd.f32 %v1311, %v1359
        %1361 = vmatmul.bf16.gmra.mxu0 %v1178
        %v1362 = vpop.f32.mrf.mxu0
        %v1363 = vadd.f32 %v1314, %v1362
        %v1364 = vpop.f32.mrf.mxu0
        %v1365 = vadd.f32 %v1316, %v1364
        %1366 = vmatmul.bf16.gmra.mxu0 %v1180
        %v1367 = vpop.f32.mrf.mxu0
        %v1368 = vadd.f32 %v1319, %v1367
        %v1369 = vpop.f32.mrf.mxu0
        %v1370 = vadd.f32 %v1321, %v1369
        %1371 = vmatmul.bf16.gmra.mxu0 %v1182
        %v1372 = vpop.f32.mrf.mxu0
        %v1373 = vadd.f32 %v1324, %v1372
        %v1374 = vpop.f32.mrf.mxu0
        %v1375 = vadd.f32 %v1326, %v1374
        %1376 = vdwg.mxu0
        %v1377 = vpack.c.bf16 %v1340, %v1338
        %v1378 = vpack.c.bf16 %v1345, %v1343
        %v1379 = vpack.c.bf16 %v1350, %v1348
        %v1380 = vpack.c.bf16 %v1355, %v1353
        %v1381 = vpack.c.bf16 %v1360, %v1358
        %v1382 = vpack.c.bf16 %v1365, %v1363
        %v1383 = vpack.c.bf16 %v1370, %v1368
        %v1384 = vpack.c.bf16 %v1375, %v1373
        %v1385 = vld [vmem:[%s5] sm:$0x1]
        %v1387 = vperm.slane %v1385, 0
        %1389 = vmatpush.bf16.msra.mxu0 %v1384
        %1390 = vmatpush.bf16.msra.mxu0 %v1383
        %1391 = vmatpush.bf16.msra.mxu0 %v1382
        %1392 = vmatpush.bf16.msra.mxu0 %v1381
        %1393 = vmatpush.bf16.msra.mxu0 %v1380
        %1394 = vmatpush.bf16.msra.mxu0 %v1379
        %1395 = vmatpush.bf16.msra.mxu0 %v1378
        %1396 = vmatpush.bf16.msra.mxu0 %v1377
        %1397 = vmatmul.bf16.gmra.mxu0 %v989
        %v1398 = vpop.f32.mrf.mxu0
        %v1399 = vadd.f32 %v1387, %v1398
        %v1400 = vpop.f32.mrf.mxu0
        %v1401 = vadd.f32 %v1387, %v1400
        %1402 = vmatmul.bf16.gmra.mxu0 %v990
        %v1403 = vpop.f32.mrf.mxu0
        %v1404 = vadd.f32 %v1387, %v1403
        %v1405 = vpop.f32.mrf.mxu0
        %v1406 = vadd.f32 %v1387, %v1405
        %1407 = vmatmul.bf16.gmra.mxu0 %v991
        %v1408 = vpop.f32.mrf.mxu0
        %v1409 = vadd.f32 %v1387, %v1408
        %v1410 = vpop.f32.mrf.mxu0
        %v1411 = vadd.f32 %v1387, %v1410
        %1412 = vmatmul.bf16.gmra.mxu0 %v992
        %v1413 = vpop.f32.mrf.mxu0
        %v1414 = vadd.f32 %v1387, %v1413
        %v1415 = vpop.f32.mrf.mxu0
        %v1416 = vadd.f32 %v1387, %v1415
        %1417 = vmatmul.bf16.gmra.mxu0 %v993
        %v1418 = vpop.f32.mrf.mxu0
        %v1419 = vadd.f32 %v1387, %v1418
        %v1420 = vpop.f32.mrf.mxu0
        %v1421 = vadd.f32 %v1387, %v1420
        %1422 = vmatmul.bf16.gmra.mxu0 %v994
        %v1423 = vpop.f32.mrf.mxu0
        %v1424 = vadd.f32 %v1387, %v1423
        %v1425 = vpop.f32.mrf.mxu0
        %v1426 = vadd.f32 %v1387, %v1425
        %1427 = vmatmul.bf16.gmra.mxu0 %v995
        %v1428 = vpop.f32.mrf.mxu0
        %v1429 = vadd.f32 %v1387, %v1428
        %v1430 = vpop.f32.mrf.mxu0
        %v1431 = vadd.f32 %v1387, %v1430
        %1432 = vmatmul.bf16.gmra.mxu0 %v996
        %v1433 = vpop.f32.mrf.mxu0
        %v1434 = vadd.f32 %v1387, %v1433
        %v1435 = vpop.f32.mrf.mxu0
        %v1436 = vadd.f32 %v1387, %v1435
        %1437 = vdwg.mxu0
        %v1438 = vtanh.pop %v1399
        %v1439 = vtanh.pop %v1401
        %v1440 = vtanh.pop %v1404
        %v1441 = vtanh.pop %v1406
        %v1442 = vtanh.pop %v1409
        %v1443 = vtanh.pop %v1411
        %v1444 = vtanh.pop %v1414
        %v1445 = vtanh.pop %v1416
        %v1446 = vtanh.pop %v1419
        %v1447 = vtanh.pop %v1421
        %v1448 = vtanh.pop %v1424
        %v1449 = vtanh.pop %v1426
        %v1450 = vtanh.pop %v1429
        %v1451 = vtanh.pop %v1431
        %v1452 = vtanh.pop %v1434
        %v1453 = vtanh.pop %v1436
        %v1454 = vld [vmem:[#allocation14] sm:$0xf]
        %v1455 = vld [vmem:[#allocation14 + $0x4] sm:$0xf]
        %v1456 = vld [vmem:[#allocation14 + $0x8] sm:$0xf]
        %v1457 = vld [vmem:[#allocation14 + $0xc] sm:$0xf]
        %v1458 = vld [vmem:[#allocation14 + $0x10] sm:$0xf]
        %v1459 = vld [vmem:[#allocation14 + $0x14] sm:$0xf]
        %v1460 = vld [vmem:[#allocation14 + $0x18] sm:$0xf]
        %v1461 = vld [vmem:[#allocation14 + $0x1c] sm:$0xf]
        %v1462 = vld [vmem:[#allocation14 + $0x20] sm:$0xf]
        %v1463 = vld [vmem:[#allocation14 + $0x24] sm:$0xf]
        %v1464 = vld [vmem:[#allocation14 + $0x28] sm:$0xf]
        %v1465 = vld [vmem:[#allocation14 + $0x2c] sm:$0xf]
        %v1466 = vld [vmem:[#allocation14 + $0x30] sm:$0xf]
        %v1467 = vld [vmem:[#allocation14 + $0x34] sm:$0xf]
        %v1468 = vld [vmem:[#allocation14 + $0x38] sm:$0xf]
        %v1469 = vld [vmem:[#allocation14 + $0x3c] sm:$0xf]
        %v1470 = vmul.f32 %v1438, %v1438
        %v1471 = vmul.f32 %v1439, %v1439
        %v1472 = vmul.f32 %v1440, %v1440
        %v1473 = vmul.f32 %v1441, %v1441
        %v1474 = vmul.f32 %v1442, %v1442
        %v1475 = vmul.f32 %v1443, %v1443
        %v1476 = vmul.f32 %v1444, %v1444
        %v1477 = vmul.f32 %v1445, %v1445
        %v1478 = vmul.f32 %v1446, %v1446
        %v1479 = vmul.f32 %v1447, %v1447
        %v1480 = vmul.f32 %v1448, %v1448
        %v1481 = vmul.f32 %v1449, %v1449
        %v1482 = vmul.f32 %v1450, %v1450
        %v1483 = vmul.f32 %v1451, %v1451
        %v1484 = vmul.f32 %v1452, %v1452
        %v1485 = vmul.f32 %v1453, %v1453
        %v1486 = vsub.f32 1.0, %v1470
        %v1487 = vsub.f32 1.0, %v1471
        %v1488 = vsub.f32 1.0, %v1472
        %v1489 = vsub.f32 1.0, %v1473
        %v1490 = vsub.f32 1.0, %v1474
        %v1491 = vsub.f32 1.0, %v1475
        %v1492 = vsub.f32 1.0, %v1476
        %v1493 = vsub.f32 1.0, %v1477
        %v1494 = vsub.f32 1.0, %v1478
        %v1495 = vsub.f32 1.0, %v1479
        %v1496 = vsub.f32 1.0, %v1480
        %v1497 = vsub.f32 1.0, %v1481
        %v1498 = vsub.f32 1.0, %v1482
        %v1499 = vsub.f32 1.0, %v1483
        %v1500 = vsub.f32 1.0, %v1484
        %v1501 = vsub.f32 1.0, %v1485
        %v1502 = vunpack.c.l.bf16 %v1454
        %v1503 = vunpack.c.l.bf16 %v1455
        %v1504 = vunpack.c.l.bf16 %v1456
        %v1505 = vunpack.c.l.bf16 %v1457
        %v1506 = vunpack.c.l.bf16 %v1458
        %v1507 = vunpack.c.l.bf16 %v1459
        %v1508 = vunpack.c.l.bf16 %v1460
        %v1509 = vunpack.c.l.bf16 %v1461
        %v1510 = vunpack.c.l.bf16 %v1462
        %v1511 = vunpack.c.l.bf16 %v1463
        %v1512 = vunpack.c.l.bf16 %v1464
        %v1513 = vunpack.c.l.bf16 %v1465
        %v1514 = vunpack.c.l.bf16 %v1466
        %v1515 = vunpack.c.l.bf16 %v1467
        %v1516 = vunpack.c.l.bf16 %v1468
        %v1517 = vunpack.c.l.bf16 %v1469
        %v1518 = vmul.f32 %v1502, %v1486
        %v1519 = vmul.f32 %v1503, %v1487
        %v1520 = vmul.f32 %v1504, %v1488
        %v1521 = vmul.f32 %v1505, %v1489
        %v1522 = vmul.f32 %v1506, %v1490
        %v1523 = vmul.f32 %v1507, %v1491
        %v1524 = vmul.f32 %v1508, %v1492
        %v1525 = vmul.f32 %v1509, %v1493
        %v1526 = vmul.f32 %v1510, %v1494
        %v1527 = vmul.f32 %v1511, %v1495
        %v1528 = vmul.f32 %v1512, %v1496
        %v1529 = vmul.f32 %v1513, %v1497
        %v1530 = vmul.f32 %v1514, %v1498
        %v1531 = vmul.f32 %v1515, %v1499
        %v1532 = vmul.f32 %v1516, %v1500
        %v1533 = vmul.f32 %v1517, %v1501
        %v1534 = vpack.c.bf16 %v1519, %v1518
        %v1535 = vpack.c.bf16 %v1521, %v1520
        %v1536 = vpack.c.bf16 %v1523, %v1522
        %v1537 = vpack.c.bf16 %v1525, %v1524
        %v1538 = vpack.c.bf16 %v1527, %v1526
        %v1539 = vpack.c.bf16 %v1529, %v1528
        %v1540 = vpack.c.bf16 %v1531, %v1530
        %v1541 = vpack.c.bf16 %v1533, %v1532
        %1542 = vmatpush.bf16.msra.mxu0 %v1541
        %1543 = vmatpush.bf16.msra.mxu0 %v1540
        %1544 = vmatpush.bf16.msra.mxu0 %v1539
        %1545 = vmatpush.bf16.msra.mxu0 %v1538
        %1546 = vmatpush.bf16.msra.mxu0 %v1537
        %1547 = vmatpush.bf16.msra.mxu0 %v1536
        %1548 = vmatpush.bf16.msra.mxu0 %v1535
        %1549 = vmatpush.bf16.msra.mxu0 %v1534
        %1550 = vmatmul.bf16.gmra.mxu0 %v989
        %v1551 = vpop.f32.mrf.mxu0
        %v1552 = vadd.f32 0.0, %v1551
        %v1553 = vpop.f32.mrf.mxu0
        %v1554 = vadd.f32 0.0, %v1553
        %1555 = vmatmul.bf16.gmra.mxu0 %v990
        %v1556 = vpop.f32.mrf.mxu0
        %v1557 = vadd.f32 0.0, %v1556
        %v1558 = vpop.f32.mrf.mxu0
        %v1559 = vadd.f32 0.0, %v1558
        %1560 = vmatmul.bf16.gmra.mxu0 %v991
        %v1561 = vpop.f32.mrf.mxu0
        %v1562 = vadd.f32 0.0, %v1561
        %v1563 = vpop.f32.mrf.mxu0
        %v1564 = vadd.f32 0.0, %v1563
        %1565 = vmatmul.bf16.gmra.mxu0 %v992
        %v1566 = vpop.f32.mrf.mxu0
        %v1567 = vadd.f32 0.0, %v1566
        %v1568 = vpop.f32.mrf.mxu0
        %v1569 = vadd.f32 0.0, %v1568
        %1570 = vmatmul.bf16.gmra.mxu0 %v993
        %v1571 = vpop.f32.mrf.mxu0
        %v1572 = vadd.f32 0.0, %v1571
        %v1573 = vpop.f32.mrf.mxu0
        %v1574 = vadd.f32 0.0, %v1573
        %1575 = vmatmul.bf16.gmra.mxu0 %v994
        %v1576 = vpop.f32.mrf.mxu0
        %v1577 = vadd.f32 0.0, %v1576
        %v1578 = vpop.f32.mrf.mxu0
        %v1579 = vadd.f32 0.0, %v1578
        %1580 = vmatmul.bf16.gmra.mxu0 %v995
        %v1581 = vpop.f32.mrf.mxu0
        %v1582 = vadd.f32 0.0, %v1581
        %v1583 = vpop.f32.mrf.mxu0
        %v1584 = vadd.f32 0.0, %v1583
        %1585 = vmatmul.bf16.gmra.mxu0 %v996
        %v1586 = vpop.f32.mrf.mxu0
        %v1587 = vadd.f32 0.0, %v1586
        %v1588 = vpop.f32.mrf.mxu0
        %v1589 = vadd.f32 0.0, %v1588
        %1590 = vdwg.mxu0
        %v1591 = vld [vmem:[#allocation12] sm:$0xff]
        %v1592 = vld [vmem:[#allocation12 + $0x8] sm:$0xff]
        %v1593 = vld [vmem:[#allocation12 + $0x10] sm:$0xff]
        %v1594 = vld [vmem:[#allocation12 + $0x18] sm:$0xff]
        %v1595 = vld [vmem:[#allocation12 + $0x20] sm:$0xff]
        %v1596 = vld [vmem:[#allocation12 + $0x28] sm:$0xff]
        %v1597 = vld [vmem:[#allocation12 + $0x30] sm:$0xff]
        %v1598 = vld [vmem:[#allocation12 + $0x38] sm:$0xff]
        %v1599 = vld [vmem:[#allocation12 + $0x40] sm:$0xff]
        %v1600 = vld [vmem:[#allocation12 + $0x48] sm:$0xff]
        %v1601 = vld [vmem:[#allocation12 + $0x50] sm:$0xff]
        %v1602 = vld [vmem:[#allocation12 + $0x58] sm:$0xff]
        %v1603 = vld [vmem:[#allocation12 + $0x60] sm:$0xff]
        %v1604 = vld [vmem:[#allocation12 + $0x68] sm:$0xff]
        %v1605 = vld [vmem:[#allocation12 + $0x70] sm:$0xff]
        %v1606 = vld [vmem:[#allocation12 + $0x78] sm:$0xff]
        %v1607 = vpack.c.bf16 %v1554, %v1552
        %v1608 = vpack.c.bf16 %v1559, %v1557
        %v1609 = vpack.c.bf16 %v1564, %v1562
        %v1610 = vpack.c.bf16 %v1569, %v1567
        %v1611 = vpack.c.bf16 %v1574, %v1572
        %v1612 = vpack.c.bf16 %v1579, %v1577
        %v1613 = vpack.c.bf16 %v1584, %v1582
        %v1614 = vpack.c.bf16 %v1589, %v1587
        %v1631 = vunpack.c.l.b16 %v1591
        %v1632 = vunpack.c.h.b16 %v1591
        %v1633 = vunpack.c.l.b16 %v1592
        %v1634 = vunpack.c.h.b16 %v1592
        %v1635 = vunpack.c.l.b16 %v1593
        %v1636 = vunpack.c.h.b16 %v1593
        %v1637 = vunpack.c.l.b16 %v1594
        %v1638 = vunpack.c.h.b16 %v1594
        %v1639 = vunpack.c.l.b16 %v1595
        %v1640 = vunpack.c.h.b16 %v1595
        %v1641 = vunpack.c.l.b16 %v1596
        %v1642 = vunpack.c.h.b16 %v1596
        %v1643 = vunpack.c.l.b16 %v1597
        %v1644 = vunpack.c.h.b16 %v1597
        %v1645 = vunpack.c.l.b16 %v1598
        %v1646 = vunpack.c.h.b16 %v1598
        %v1647 = vunpack.c.l.b16 %v1599
        %v1648 = vunpack.c.h.b16 %v1599
        %v1649 = vunpack.c.l.b16 %v1600
        %v1650 = vunpack.c.h.b16 %v1600
        %v1651 = vunpack.c.l.b16 %v1601
        %v1652 = vunpack.c.h.b16 %v1601
        %v1653 = vunpack.c.l.b16 %v1602
        %v1654 = vunpack.c.h.b16 %v1602
        %v1655 = vunpack.c.l.b16 %v1603
        %v1656 = vunpack.c.h.b16 %v1603
        %v1657 = vunpack.c.l.b16 %v1604
        %v1658 = vunpack.c.h.b16 %v1604
        %v1659 = vunpack.c.l.b16 %v1605
        %v1660 = vunpack.c.h.b16 %v1605
        %v1661 = vunpack.c.l.b16 %v1606
        %v1662 = vunpack.c.h.b16 %v1606
        %v1663 = vpack.c.b16 %v1633, %v1631
        %v1664 = vpack.c.b16 %v1634, %v1632
        %v1665 = vpack.c.b16 %v1637, %v1635
        %v1666 = vpack.c.b16 %v1638, %v1636
        %v1667 = vpack.c.b16 %v1641, %v1639
        %v1668 = vpack.c.b16 %v1642, %v1640
        %v1669 = vpack.c.b16 %v1645, %v1643
        %v1670 = vpack.c.b16 %v1646, %v1644
        %v1671 = vpack.c.b16 %v1649, %v1647
        %v1672 = vpack.c.b16 %v1650, %v1648
        %v1673 = vpack.c.b16 %v1653, %v1651
        %v1674 = vpack.c.b16 %v1654, %v1652
        %v1675 = vpack.c.b16 %v1657, %v1655
        %v1676 = vpack.c.b16 %v1658, %v1656
        %v1677 = vpack.c.b16 %v1661, %v1659
        %v1678 = vpack.c.b16 %v1662, %v1660
        %1695 = vmatpush.bf16.msra.mxu0 %v1677
        %1696 = vmatpush.bf16.msra.mxu0 %v1675
        %1697 = vmatpush.bf16.msra.mxu0 %v1673
        %1698 = vmatpush.bf16.msra.mxu0 %v1671
        %1699 = vmatpush.bf16.msra.mxu0 %v1669
        %1700 = vmatpush.bf16.msra.mxu0 %v1667
        %1701 = vmatpush.bf16.msra.mxu0 %v1665
        %1702 = vmatpush.bf16.msra.mxu0 %v1663
        %1703 = vmatmul.bf16.gmra.mxu0 %v1607
        %v1704 = vpop.f32.mrf.mxu0
        %v1705 = vadd.f32 0.0, %v1704
        %v1706 = vpop.f32.mrf.mxu0
        %v1707 = vadd.f32 0.0, %v1706
        %1708 = vmatmul.bf16.gmra.mxu0 %v1608
        %v1709 = vpop.f32.mrf.mxu0
        %v1710 = vadd.f32 0.0, %v1709
        %v1711 = vpop.f32.mrf.mxu0
        %v1712 = vadd.f32 0.0, %v1711
        %1713 = vmatmul.bf16.gmra.mxu0 %v1609
        %v1714 = vpop.f32.mrf.mxu0
        %v1715 = vadd.f32 0.0, %v1714
        %v1716 = vpop.f32.mrf.mxu0
        %v1717 = vadd.f32 0.0, %v1716
        %1718 = vmatmul.bf16.gmra.mxu0 %v1610
        %v1719 = vpop.f32.mrf.mxu0
        %v1720 = vadd.f32 0.0, %v1719
        %v1721 = vpop.f32.mrf.mxu0
        %v1722 = vadd.f32 0.0, %v1721
        %1723 = vmatmul.bf16.gmra.mxu0 %v1611
        %v1724 = vpop.f32.mrf.mxu0
        %v1725 = vadd.f32 0.0, %v1724
        %v1726 = vpop.f32.mrf.mxu0
        %v1727 = vadd.f32 0.0, %v1726
        %1728 = vmatmul.bf16.gmra.mxu0 %v1612
        %v1729 = vpop.f32.mrf.mxu0
        %v1730 = vadd.f32 0.0, %v1729
        %v1731 = vpop.f32.mrf.mxu0
        %v1732 = vadd.f32 0.0, %v1731
        %1733 = vmatmul.bf16.gmra.mxu0 %v1613
        %v1734 = vpop.f32.mrf.mxu0
        %v1735 = vadd.f32 0.0, %v1734
        %v1736 = vpop.f32.mrf.mxu0
        %v1737 = vadd.f32 0.0, %v1736
        %1738 = vmatmul.bf16.gmra.mxu0 %v1614
        %v1739 = vpop.f32.mrf.mxu0
        %v1740 = vadd.f32 0.0, %v1739
        %v1741 = vpop.f32.mrf.mxu0
        %v1742 = vadd.f32 0.0, %v1741
        %1743 = vdwg.mxu0
        %1744 = vmatpush.bf16.msra.mxu0 %v1678
        %1745 = vmatpush.bf16.msra.mxu0 %v1676
        %1746 = vmatpush.bf16.msra.mxu0 %v1674
        %1747 = vmatpush.bf16.msra.mxu0 %v1672
        %1748 = vmatpush.bf16.msra.mxu0 %v1670
        %1749 = vmatpush.bf16.msra.mxu0 %v1668
        %1750 = vmatpush.bf16.msra.mxu0 %v1666
        %1751 = vmatpush.bf16.msra.mxu0 %v1664
        %1752 = vmatmul.bf16.gmra.mxu0 %v1607
        %v1753 = vpop.f32.mrf.mxu0
        %v1754 = vadd.f32 0.0, %v1753
        %v1755 = vpop.f32.mrf.mxu0
        %v1756 = vadd.f32 0.0, %v1755
        %1757 = vmatmul.bf16.gmra.mxu0 %v1608
        %v1758 = vpop.f32.mrf.mxu0
        %v1759 = vadd.f32 0.0, %v1758
        %v1760 = vpop.f32.mrf.mxu0
        %v1761 = vadd.f32 0.0, %v1760
        %1762 = vmatmul.bf16.gmra.mxu0 %v1609
        %v1763 = vpop.f32.mrf.mxu0
        %v1764 = vadd.f32 0.0, %v1763
        %v1765 = vpop.f32.mrf.mxu0
        %v1766 = vadd.f32 0.0, %v1765
        %1767 = vmatmul.bf16.gmra.mxu0 %v1610
        %v1768 = vpop.f32.mrf.mxu0
        %v1769 = vadd.f32 0.0, %v1768
        %v1770 = vpop.f32.mrf.mxu0
        %v1771 = vadd.f32 0.0, %v1770
        %1772 = vmatmul.bf16.gmra.mxu0 %v1611
        %v1773 = vpop.f32.mrf.mxu0
        %v1774 = vadd.f32 0.0, %v1773
        %v1775 = vpop.f32.mrf.mxu0
        %v1776 = vadd.f32 0.0, %v1775
        %1777 = vmatmul.bf16.gmra.mxu0 %v1612
        %v1778 = vpop.f32.mrf.mxu0
        %v1779 = vadd.f32 0.0, %v1778
        %v1780 = vpop.f32.mrf.mxu0
        %v1781 = vadd.f32 0.0, %v1780
        %1782 = vmatmul.bf16.gmra.mxu0 %v1613
        %v1783 = vpop.f32.mrf.mxu0
        %v1784 = vadd.f32 0.0, %v1783
        %v1785 = vpop.f32.mrf.mxu0
        %v1786 = vadd.f32 0.0, %v1785
        %1787 = vmatmul.bf16.gmra.mxu0 %v1614
        %v1788 = vpop.f32.mrf.mxu0
        %v1789 = vadd.f32 0.0, %v1788
        %v1790 = vpop.f32.mrf.mxu0
        %v1791 = vadd.f32 0.0, %v1790
        %1792 = vdwg.mxu0
        %v1793 = vmul.f32 %v1103, %v1103
        %v1794 = vmul.f32 %v1104, %v1104
        %v1795 = vmul.f32 %v1105, %v1105
        %v1796 = vmul.f32 %v1106, %v1106
        %v1797 = vmul.f32 %v1107, %v1107
        %v1798 = vmul.f32 %v1108, %v1108
        %v1799 = vmul.f32 %v1109, %v1109
        %v1800 = vmul.f32 %v1110, %v1110
        %v1801 = vmul.f32 %v1111, %v1111
        %v1802 = vmul.f32 %v1112, %v1112
        %v1803 = vmul.f32 %v1113, %v1113
        %v1804 = vmul.f32 %v1114, %v1114
        %v1805 = vmul.f32 %v1115, %v1115
        %v1806 = vmul.f32 %v1116, %v1116
        %v1807 = vmul.f32 %v1117, %v1117
        %v1808 = vmul.f32 %v1118, %v1118
        %v1809 = vmul.f32 %v1119, %v1119
        %v1810 = vmul.f32 %v1120, %v1120
        %v1811 = vmul.f32 %v1121, %v1121
        %v1812 = vmul.f32 %v1122, %v1122
        %v1813 = vmul.f32 %v1123, %v1123
        %v1814 = vmul.f32 %v1124, %v1124
        %v1815 = vmul.f32 %v1125, %v1125
        %v1816 = vmul.f32 %v1126, %v1126
        %v1817 = vmul.f32 %v1127, %v1127
        %v1818 = vmul.f32 %v1128, %v1128
        %v1819 = vmul.f32 %v1129, %v1129
        %v1820 = vmul.f32 %v1130, %v1130
        %v1821 = vmul.f32 %v1131, %v1131
        %v1822 = vmul.f32 %v1132, %v1132
        %v1823 = vmul.f32 %v1133, %v1133
        %v1824 = vmul.f32 %v1134, %v1134
        %v1825 = vsub.f32 1.0, %v1793
        %v1826 = vsub.f32 1.0, %v1794
        %v1827 = vsub.f32 1.0, %v1795
        %v1828 = vsub.f32 1.0, %v1796
        %v1829 = vsub.f32 1.0, %v1797
        %v1830 = vsub.f32 1.0, %v1798
        %v1831 = vsub.f32 1.0, %v1799
        %v1832 = vsub.f32 1.0, %v1800
        %v1833 = vsub.f32 1.0, %v1801
        %v1834 = vsub.f32 1.0, %v1802
        %v1835 = vsub.f32 1.0, %v1803
        %v1836 = vsub.f32 1.0, %v1804
        %v1837 = vsub.f32 1.0, %v1805
        %v1838 = vsub.f32 1.0, %v1806
        %v1839 = vsub.f32 1.0, %v1807
        %v1840 = vsub.f32 1.0, %v1808
        %v1841 = vsub.f32 1.0, %v1809
        %v1842 = vsub.f32 1.0, %v1810
        %v1843 = vsub.f32 1.0, %v1811
        %v1844 = vsub.f32 1.0, %v1812
        %v1845 = vsub.f32 1.0, %v1813
        %v1846 = vsub.f32 1.0, %v1814
        %v1847 = vsub.f32 1.0, %v1815
        %v1848 = vsub.f32 1.0, %v1816
        %v1849 = vsub.f32 1.0, %v1817
        %v1850 = vsub.f32 1.0, %v1818
        %v1851 = vsub.f32 1.0, %v1819
        %v1852 = vsub.f32 1.0, %v1820
        %v1853 = vsub.f32 1.0, %v1821
        %v1854 = vsub.f32 1.0, %v1822
        %v1855 = vsub.f32 1.0, %v1823
        %v1856 = vsub.f32 1.0, %v1824
        %v1857 = vmul.f32 %v1705, %v1825
        %v1858 = vmul.f32 %v1754, %v1826
        %v1859 = vmul.f32 %v1707, %v1827
        %v1860 = vmul.f32 %v1756, %v1828
        %v1861 = vmul.f32 %v1710, %v1829
        %v1862 = vmul.f32 %v1759, %v1830
        %v1863 = vmul.f32 %v1712, %v1831
        %v1864 = vmul.f32 %v1761, %v1832
        %v1865 = vmul.f32 %v1715, %v1833
        %v1866 = vmul.f32 %v1764, %v1834
        %v1867 = vmul.f32 %v1717, %v1835
        %v1868 = vmul.f32 %v1766, %v1836
        %v1869 = vmul.f32 %v1720, %v1837
        %v1870 = vmul.f32 %v1769, %v1838
        %v1871 = vmul.f32 %v1722, %v1839
        %v1872 = vmul.f32 %v1771, %v1840
        %v1873 = vmul.f32 %v1725, %v1841
        %v1874 = vmul.f32 %v1774, %v1842
        %v1875 = vmul.f32 %v1727, %v1843
        %v1876 = vmul.f32 %v1776, %v1844
        %v1877 = vmul.f32 %v1730, %v1845
        %v1878 = vmul.f32 %v1779, %v1846
        %v1879 = vmul.f32 %v1732, %v1847
        %v1880 = vmul.f32 %v1781, %v1848
        %v1881 = vmul.f32 %v1735, %v1849
        %v1882 = vmul.f32 %v1784, %v1850
        %v1883 = vmul.f32 %v1737, %v1851
        %v1884 = vmul.f32 %v1786, %v1852
        %v1885 = vmul.f32 %v1740, %v1853
        %v1886 = vmul.f32 %v1789, %v1854
        %v1887 = vmul.f32 %v1742, %v1855
        %v1888 = vmul.f32 %v1791, %v1856
        %v1889 = vpack.c.bf16 %v1859, %v1857
        %v1890 = vpack.c.bf16 %v1860, %v1858
        %v1891 = vpack.c.bf16 %v1863, %v1861
        %v1892 = vpack.c.bf16 %v1864, %v1862
        %v1893 = vpack.c.bf16 %v1867, %v1865
        %v1894 = vpack.c.bf16 %v1868, %v1866
        %v1895 = vpack.c.bf16 %v1871, %v1869
        %v1896 = vpack.c.bf16 %v1872, %v1870
        %v1897 = vpack.c.bf16 %v1875, %v1873
        %v1898 = vpack.c.bf16 %v1876, %v1874
        %v1899 = vpack.c.bf16 %v1879, %v1877
        %v1900 = vpack.c.bf16 %v1880, %v1878
        %v1901 = vpack.c.bf16 %v1883, %v1881
        %v1902 = vpack.c.bf16 %v1884, %v1882
        %v1903 = vpack.c.bf16 %v1887, %v1885
        %v1904 = vpack.c.bf16 %v1888, %v1886
        %1905 = vmatpush.bf16.msra.mxu0 %v1903
        %1906 = vmatpush.bf16.msra.mxu0 %v1901
        %1907 = vmatpush.bf16.msra.mxu0 %v1899
        %1908 = vmatpush.bf16.msra.mxu0 %v1897
        %1909 = vmatpush.bf16.msra.mxu0 %v1895
        %1910 = vmatpush.bf16.msra.mxu0 %v1893
        %1911 = vmatpush.bf16.msra.mxu0 %v1891
        %1912 = vmatpush.bf16.msra.mxu0 %v1889
        %1913 = vmatmul.bf16.gmra.mxu0 %v989
        %v1914 = vpop.f32.mrf.mxu0
        %v1915 = vadd.f32 0.0, %v1914
        %v1916 = vpop.f32.mrf.mxu0
        %v1917 = vadd.f32 0.0, %v1916
        %1918 = vmatmul.bf16.gmra.mxu0 %v990
        %v1919 = vpop.f32.mrf.mxu0
        %v1920 = vadd.f32 0.0, %v1919
        %v1921 = vpop.f32.mrf.mxu0
        %v1922 = vadd.f32 0.0, %v1921
        %1923 = vmatmul.bf16.gmra.mxu0 %v991
        %v1924 = vpop.f32.mrf.mxu0
        %v1925 = vadd.f32 0.0, %v1924
        %v1926 = vpop.f32.mrf.mxu0
        %v1927 = vadd.f32 0.0, %v1926
        %1928 = vmatmul.bf16.gmra.mxu0 %v992
        %v1929 = vpop.f32.mrf.mxu0
        %v1930 = vadd.f32 0.0, %v1929
        %v1931 = vpop.f32.mrf.mxu0
        %v1932 = vadd.f32 0.0, %v1931
        %1933 = vmatmul.bf16.gmra.mxu0 %v993
        %v1934 = vpop.f32.mrf.mxu0
        %v1935 = vadd.f32 0.0, %v1934
        %v1936 = vpop.f32.mrf.mxu0
        %v1937 = vadd.f32 0.0, %v1936
        %1938 = vmatmul.bf16.gmra.mxu0 %v994
        %v1939 = vpop.f32.mrf.mxu0
        %v1940 = vadd.f32 0.0, %v1939
        %v1941 = vpop.f32.mrf.mxu0
        %v1942 = vadd.f32 0.0, %v1941
        %1943 = vmatmul.bf16.gmra.mxu0 %v995
        %v1944 = vpop.f32.mrf.mxu0
        %v1945 = vadd.f32 0.0, %v1944
        %v1946 = vpop.f32.mrf.mxu0
        %v1947 = vadd.f32 0.0, %v1946
        %1948 = vmatmul.bf16.gmra.mxu0 %v996
        %v1949 = vpop.f32.mrf.mxu0
        %v1950 = vadd.f32 0.0, %v1949
        %v1951 = vpop.f32.mrf.mxu0
        %v1952 = vadd.f32 0.0, %v1951
        %1953 = vdwg.mxu0
        %1954 = vmatpush.bf16.msra.mxu0 %v1904
        %1955 = vmatpush.bf16.msra.mxu0 %v1902
        %1956 = vmatpush.bf16.msra.mxu0 %v1900
        %1957 = vmatpush.bf16.msra.mxu0 %v1898
        %1958 = vmatpush.bf16.msra.mxu0 %v1896
        %1959 = vmatpush.bf16.msra.mxu0 %v1894
        %1960 = vmatpush.bf16.msra.mxu0 %v1892
        %1961 = vmatpush.bf16.msra.mxu0 %v1890
        %1962 = vmatmul.bf16.gmra.mxu0 %v989
        %v1963 = vpop.f32.mrf.mxu0
        %v1964 = vadd.f32 0.0, %v1963
        %v1965 = vpop.f32.mrf.mxu0
        %v1966 = vadd.f32 0.0, %v1965
        %1967 = vmatmul.bf16.gmra.mxu0 %v990
        %v1968 = vpop.f32.mrf.mxu0
        %v1969 = vadd.f32 0.0, %v1968
        %v1970 = vpop.f32.mrf.mxu0
        %v1971 = vadd.f32 0.0, %v1970
        %1972 = vmatmul.bf16.gmra.mxu0 %v991
        %v1973 = vpop.f32.mrf.mxu0
        %v1974 = vadd.f32 0.0, %v1973
        %v1975 = vpop.f32.mrf.mxu0
        %v1976 = vadd.f32 0.0, %v1975
        %1977 = vmatmul.bf16.gmra.mxu0 %v992
        %v1978 = vpop.f32.mrf.mxu0
        %v1979 = vadd.f32 0.0, %v1978
        %v1980 = vpop.f32.mrf.mxu0
        %v1981 = vadd.f32 0.0, %v1980
        %1982 = vmatmul.bf16.gmra.mxu0 %v993
        %v1983 = vpop.f32.mrf.mxu0
        %v1984 = vadd.f32 0.0, %v1983
        %v1985 = vpop.f32.mrf.mxu0
        %v1986 = vadd.f32 0.0, %v1985
        %1987 = vmatmul.bf16.gmra.mxu0 %v994
        %v1988 = vpop.f32.mrf.mxu0
        %v1989 = vadd.f32 0.0, %v1988
        %v1990 = vpop.f32.mrf.mxu0
        %v1991 = vadd.f32 0.0, %v1990
        %1992 = vmatmul.bf16.gmra.mxu0 %v995
        %v1993 = vpop.f32.mrf.mxu0
        %v1994 = vadd.f32 0.0, %v1993
        %v1995 = vpop.f32.mrf.mxu0
        %v1996 = vadd.f32 0.0, %v1995
        %1997 = vmatmul.bf16.gmra.mxu0 %v996
        %v1998 = vpop.f32.mrf.mxu0
        %v1999 = vadd.f32 0.0, %v1998
        %v2000 = vpop.f32.mrf.mxu0
        %v2001 = vadd.f32 0.0, %v2000
        %2002 = vdwg.mxu0
        %v2003 = vld [vmem:[#allocation11] sm:$0xff]
        %v2004 = vld [vmem:[#allocation11 + $0x8] sm:$0xff]
        %v2005 = vld [vmem:[#allocation11 + $0x10] sm:$0xff]
        %v2006 = vld [vmem:[#allocation11 + $0x18] sm:$0xff]
        %v2007 = vld [vmem:[#allocation11 + $0x20] sm:$0xff]
        %v2008 = vld [vmem:[#allocation11 + $0x28] sm:$0xff]
        %v2009 = vld [vmem:[#allocation11 + $0x30] sm:$0xff]
        %v2010 = vld [vmem:[#allocation11 + $0x38] sm:$0xff]
        %v2011 = vld [vmem:[#allocation11 + $0x40] sm:$0xff]
        %v2012 = vld [vmem:[#allocation11 + $0x48] sm:$0xff]
        %v2013 = vld [vmem:[#allocation11 + $0x50] sm:$0xff]
        %v2014 = vld [vmem:[#allocation11 + $0x58] sm:$0xff]
        %v2015 = vld [vmem:[#allocation11 + $0x60] sm:$0xff]
        %v2016 = vld [vmem:[#allocation11 + $0x68] sm:$0xff]
        %v2017 = vld [vmem:[#allocation11 + $0x70] sm:$0xff]
        %v2018 = vld [vmem:[#allocation11 + $0x78] sm:$0xff]
        %v2019 = vld [vmem:[#allocation11 + $0x80] sm:$0xff]
        %v2020 = vld [vmem:[#allocation11 + $0x88] sm:$0xff]
        %v2021 = vld [vmem:[#allocation11 + $0x90] sm:$0xff]
        %v2022 = vld [vmem:[#allocation11 + $0x98] sm:$0xff]
        %v2023 = vld [vmem:[#allocation11 + $0xa0] sm:$0xff]
        %v2024 = vld [vmem:[#allocation11 + $0xa8] sm:$0xff]
        %v2025 = vld [vmem:[#allocation11 + $0xb0] sm:$0xff]
        %v2026 = vld [vmem:[#allocation11 + $0xb8] sm:$0xff]
        %v2027 = vld [vmem:[#allocation11 + $0xc0] sm:$0xff]
        %v2028 = vld [vmem:[#allocation11 + $0xc8] sm:$0xff]
        %v2029 = vld [vmem:[#allocation11 + $0xd0] sm:$0xff]
        %v2030 = vld [vmem:[#allocation11 + $0xd8] sm:$0xff]
        %v2031 = vld [vmem:[#allocation11 + $0xe0] sm:$0xff]
        %v2032 = vld [vmem:[#allocation11 + $0xe8] sm:$0xff]
        %v2033 = vld [vmem:[#allocation11 + $0xf0] sm:$0xff]
        %v2034 = vld [vmem:[#allocation11 + $0xf8] sm:$0xff]
        %v2035 = vpack.c.bf16 %v1917, %v1915
        %v2036 = vpack.c.bf16 %v1966, %v1964
        %v2037 = vpack.c.bf16 %v1922, %v1920
        %v2038 = vpack.c.bf16 %v1971, %v1969
        %v2039 = vpack.c.bf16 %v1927, %v1925
        %v2040 = vpack.c.bf16 %v1976, %v1974
        %v2041 = vpack.c.bf16 %v1932, %v1930
        %v2042 = vpack.c.bf16 %v1981, %v1979
        %v2043 = vpack.c.bf16 %v1937, %v1935
        %v2044 = vpack.c.bf16 %v1986, %v1984
        %v2045 = vpack.c.bf16 %v1942, %v1940
        %v2046 = vpack.c.bf16 %v1991, %v1989
        %v2047 = vpack.c.bf16 %v1947, %v1945
        %v2048 = vpack.c.bf16 %v1996, %v1994
        %v2049 = vpack.c.bf16 %v1952, %v1950
        %v2050 = vpack.c.bf16 %v2001, %v1999
        %v2083 = vunpack.c.l.b16 %v2003
        %v2084 = vunpack.c.h.b16 %v2003
        %v2085 = vunpack.c.l.b16 %v2004
        %v2086 = vunpack.c.h.b16 %v2004
        %v2087 = vunpack.c.l.b16 %v2005
        %v2088 = vunpack.c.h.b16 %v2005
        %v2089 = vunpack.c.l.b16 %v2006
        %v2090 = vunpack.c.h.b16 %v2006
        %v2091 = vunpack.c.l.b16 %v2007
        %v2092 = vunpack.c.h.b16 %v2007
        %v2093 = vunpack.c.l.b16 %v2008
        %v2094 = vunpack.c.h.b16 %v2008
        %v2095 = vunpack.c.l.b16 %v2009
        %v2096 = vunpack.c.h.b16 %v2009
        %v2097 = vunpack.c.l.b16 %v2010
        %v2098 = vunpack.c.h.b16 %v2010
        %v2099 = vunpack.c.l.b16 %v2011
        %v2100 = vunpack.c.h.b16 %v2011
        %v2101 = vunpack.c.l.b16 %v2012
        %v2102 = vunpack.c.h.b16 %v2012
        %v2103 = vunpack.c.l.b16 %v2013
        %v2104 = vunpack.c.h.b16 %v2013
        %v2105 = vunpack.c.l.b16 %v2014
        %v2106 = vunpack.c.h.b16 %v2014
        %v2107 = vunpack.c.l.b16 %v2015
        %v2108 = vunpack.c.h.b16 %v2015
        %v2109 = vunpack.c.l.b16 %v2016
        %v2110 = vunpack.c.h.b16 %v2016
        %v2111 = vunpack.c.l.b16 %v2017
        %v2112 = vunpack.c.h.b16 %v2017
        %v2113 = vunpack.c.l.b16 %v2018
        %v2114 = vunpack.c.h.b16 %v2018
        %v2115 = vunpack.c.l.b16 %v2019
        %v2116 = vunpack.c.h.b16 %v2019
        %v2117 = vunpack.c.l.b16 %v2020
        %v2118 = vunpack.c.h.b16 %v2020
        %v2119 = vunpack.c.l.b16 %v2021
        %v2120 = vunpack.c.h.b16 %v2021
        %v2121 = vunpack.c.l.b16 %v2022
        %v2122 = vunpack.c.h.b16 %v2022
        %v2123 = vunpack.c.l.b16 %v2023
        %v2124 = vunpack.c.h.b16 %v2023
        %v2125 = vunpack.c.l.b16 %v2024
        %v2126 = vunpack.c.h.b16 %v2024
        %v2127 = vunpack.c.l.b16 %v2025
        %v2128 = vunpack.c.h.b16 %v2025
        %v2129 = vunpack.c.l.b16 %v2026
        %v2130 = vunpack.c.h.b16 %v2026
        %v2131 = vunpack.c.l.b16 %v2027
        %v2132 = vunpack.c.h.b16 %v2027
        %v2133 = vunpack.c.l.b16 %v2028
        %v2134 = vunpack.c.h.b16 %v2028
        %v2135 = vunpack.c.l.b16 %v2029
        %v2136 = vunpack.c.h.b16 %v2029
        %v2137 = vunpack.c.l.b16 %v2030
        %v2138 = vunpack.c.h.b16 %v2030
        %v2139 = vunpack.c.l.b16 %v2031
        %v2140 = vunpack.c.h.b16 %v2031
        %v2141 = vunpack.c.l.b16 %v2032
        %v2142 = vunpack.c.h.b16 %v2032
        %v2143 = vunpack.c.l.b16 %v2033
        %v2144 = vunpack.c.h.b16 %v2033
        %v2145 = vunpack.c.l.b16 %v2034
        %v2146 = vunpack.c.h.b16 %v2034
        %v2147 = vpack.c.b16 %v2085, %v2083
        %v2148 = vpack.c.b16 %v2086, %v2084
        %v2149 = vpack.c.b16 %v2089, %v2087
        %v2150 = vpack.c.b16 %v2090, %v2088
        %v2151 = vpack.c.b16 %v2093, %v2091
        %v2152 = vpack.c.b16 %v2094, %v2092
        %v2153 = vpack.c.b16 %v2097, %v2095
        %v2154 = vpack.c.b16 %v2098, %v2096
        %v2155 = vpack.c.b16 %v2101, %v2099
        %v2156 = vpack.c.b16 %v2102, %v2100
        %v2157 = vpack.c.b16 %v2105, %v2103
        %v2158 = vpack.c.b16 %v2106, %v2104
        %v2159 = vpack.c.b16 %v2109, %v2107
        %v2160 = vpack.c.b16 %v2110, %v2108
        %v2161 = vpack.c.b16 %v2113, %v2111
        %v2162 = vpack.c.b16 %v2114, %v2112
        %v2163 = vpack.c.b16 %v2117, %v2115
        %v2164 = vpack.c.b16 %v2118, %v2116
        %v2165 = vpack.c.b16 %v2121, %v2119
        %v2166 = vpack.c.b16 %v2122, %v2120
        %v2167 = vpack.c.b16 %v2125, %v2123
        %v2168 = vpack.c.b16 %v2126, %v2124
        %v2169 = vpack.c.b16 %v2129, %v2127
        %v2170 = vpack.c.b16 %v2130, %v2128
        %v2171 = vpack.c.b16 %v2133, %v2131
        %v2172 = vpack.c.b16 %v2134, %v2132
        %v2173 = vpack.c.b16 %v2137, %v2135
        %v2174 = vpack.c.b16 %v2138, %v2136
        %v2175 = vpack.c.b16 %v2141, %v2139
        %v2176 = vpack.c.b16 %v2142, %v2140
        %v2177 = vpack.c.b16 %v2145, %v2143
        %v2178 = vpack.c.b16 %v2146, %v2144
        %2211 = vmatpush.bf16.msra.mxu0 %v2161
        %2212 = vmatpush.bf16.msra.mxu0 %v2159
        %2213 = vmatpush.bf16.msra.mxu0 %v2157
        %2214 = vmatpush.bf16.msra.mxu0 %v2155
        %2215 = vmatpush.bf16.msra.mxu0 %v2153
        %2216 = vmatpush.bf16.msra.mxu0 %v2151
        %2217 = vmatpush.bf16.msra.mxu0 %v2149
        %2218 = vmatpush.bf16.msra.mxu0 %v2147
        %2219 = vmatmul.bf16.gmra.mxu0 %v2035
        %v2220 = vpop.f32.mrf.mxu0
        %v2221 = vadd.f32 0.0, %v2220
        %v2222 = vpop.f32.mrf.mxu0
        %v2223 = vadd.f32 0.0, %v2222
        %2224 = vmatmul.bf16.gmra.mxu0 %v2037
        %v2225 = vpop.f32.mrf.mxu0
        %v2226 = vadd.f32 0.0, %v2225
        %v2227 = vpop.f32.mrf.mxu0
        %v2228 = vadd.f32 0.0, %v2227
        %2229 = vmatmul.bf16.gmra.mxu0 %v2039
        %v2230 = vpop.f32.mrf.mxu0
        %v2231 = vadd.f32 0.0, %v2230
        %v2232 = vpop.f32.mrf.mxu0
        %v2233 = vadd.f32 0.0, %v2232
        %2234 = vmatmul.bf16.gmra.mxu0 %v2041
        %v2235 = vpop.f32.mrf.mxu0
        %v2236 = vadd.f32 0.0, %v2235
        %v2237 = vpop.f32.mrf.mxu0
        %v2238 = vadd.f32 0.0, %v2237
        %2239 = vmatmul.bf16.gmra.mxu0 %v2043
        %v2240 = vpop.f32.mrf.mxu0
        %v2241 = vadd.f32 0.0, %v2240
        %v2242 = vpop.f32.mrf.mxu0
        %v2243 = vadd.f32 0.0, %v2242
        %2244 = vmatmul.bf16.gmra.mxu0 %v2045
        %v2245 = vpop.f32.mrf.mxu0
        %v2246 = vadd.f32 0.0, %v2245
        %v2247 = vpop.f32.mrf.mxu0
        %v2248 = vadd.f32 0.0, %v2247
        %2249 = vmatmul.bf16.gmra.mxu0 %v2047
        %v2250 = vpop.f32.mrf.mxu0
        %v2251 = vadd.f32 0.0, %v2250
        %v2252 = vpop.f32.mrf.mxu0
        %v2253 = vadd.f32 0.0, %v2252
        %2254 = vmatmul.bf16.gmra.mxu0 %v2049
        %v2255 = vpop.f32.mrf.mxu0
        %v2256 = vadd.f32 0.0, %v2255
        %v2257 = vpop.f32.mrf.mxu0
        %v2258 = vadd.f32 0.0, %v2257
        %2259 = vdwg.mxu0
        %2260 = vmatpush.bf16.msra.mxu0 %v2177
        %2261 = vmatpush.bf16.msra.mxu0 %v2175
        %2262 = vmatpush.bf16.msra.mxu0 %v2173
        %2263 = vmatpush.bf16.msra.mxu0 %v2171
        %2264 = vmatpush.bf16.msra.mxu0 %v2169
        %2265 = vmatpush.bf16.msra.mxu0 %v2167
        %2266 = vmatpush.bf16.msra.mxu0 %v2165
        %2267 = vmatpush.bf16.msra.mxu0 %v2163
        %2268 = vmatmul.bf16.gmra.mxu0 %v2036
        %v2269 = vpop.f32.mrf.mxu0
        %v2270 = vadd.f32 %v2221, %v2269
        %v2271 = vpop.f32.mrf.mxu0
        %v2272 = vadd.f32 %v2223, %v2271
        %2273 = vmatmul.bf16.gmra.mxu0 %v2038
        %v2274 = vpop.f32.mrf.mxu0
        %v2275 = vadd.f32 %v2226, %v2274
        %v2276 = vpop.f32.mrf.mxu0
        %v2277 = vadd.f32 %v2228, %v2276
        %2278 = vmatmul.bf16.gmra.mxu0 %v2040
        %v2279 = vpop.f32.mrf.mxu0
        %v2280 = vadd.f32 %v2231, %v2279
        %v2281 = vpop.f32.mrf.mxu0
        %v2282 = vadd.f32 %v2233, %v2281
        %2283 = vmatmul.bf16.gmra.mxu0 %v2042
        %v2284 = vpop.f32.mrf.mxu0
        %v2285 = vadd.f32 %v2236, %v2284
        %v2286 = vpop.f32.mrf.mxu0
        %v2287 = vadd.f32 %v2238, %v2286
        %2288 = vmatmul.bf16.gmra.mxu0 %v2044
        %v2289 = vpop.f32.mrf.mxu0
        %v2290 = vadd.f32 %v2241, %v2289
        %v2291 = vpop.f32.mrf.mxu0
        %v2292 = vadd.f32 %v2243, %v2291
        %2293 = vmatmul.bf16.gmra.mxu0 %v2046
        %v2294 = vpop.f32.mrf.mxu0
        %v2295 = vadd.f32 %v2246, %v2294
        %v2296 = vpop.f32.mrf.mxu0
        %v2297 = vadd.f32 %v2248, %v2296
        %2298 = vmatmul.bf16.gmra.mxu0 %v2048
        %v2299 = vpop.f32.mrf.mxu0
        %v2300 = vadd.f32 %v2251, %v2299
        %v2301 = vpop.f32.mrf.mxu0
        %v2302 = vadd.f32 %v2253, %v2301
        %2303 = vmatmul.bf16.gmra.mxu0 %v2050
        %v2304 = vpop.f32.mrf.mxu0
        %v2305 = vadd.f32 %v2256, %v2304
        %v2306 = vpop.f32.mrf.mxu0
        %v2307 = vadd.f32 %v2258, %v2306
        %2308 = vdwg.mxu0
        %2309 = vmatpush.bf16.msra.mxu0 %v2162
        %2310 = vmatpush.bf16.msra.mxu0 %v2160
        %2311 = vmatpush.bf16.msra.mxu0 %v2158
        %2312 = vmatpush.bf16.msra.mxu0 %v2156
        %2313 = vmatpush.bf16.msra.mxu0 %v2154
        %2314 = vmatpush.bf16.msra.mxu0 %v2152
        %2315 = vmatpush.bf16.msra.mxu0 %v2150
        %2316 = vmatpush.bf16.msra.mxu0 %v2148
        %2317 = vmatmul.bf16.gmra.mxu0 %v2035
        %v2318 = vpop.f32.mrf.mxu0
        %v2319 = vadd.f32 0.0, %v2318
        %v2320 = vpop.f32.mrf.mxu0
        %v2321 = vadd.f32 0.0, %v2320
        %2322 = vmatmul.bf16.gmra.mxu0 %v2037
        %v2323 = vpop.f32.mrf.mxu0
        %v2324 = vadd.f32 0.0, %v2323
        %v2325 = vpop.f32.mrf.mxu0
        %v2326 = vadd.f32 0.0, %v2325
        %2327 = vmatmul.bf16.gmra.mxu0 %v2039
        %v2328 = vpop.f32.mrf.mxu0
        %v2329 = vadd.f32 0.0, %v2328
        %v2330 = vpop.f32.mrf.mxu0
        %v2331 = vadd.f32 0.0, %v2330
        %2332 = vmatmul.bf16.gmra.mxu0 %v2041
        %v2333 = vpop.f32.mrf.mxu0
        %v2334 = vadd.f32 0.0, %v2333
        %v2335 = vpop.f32.mrf.mxu0
        %v2336 = vadd.f32 0.0, %v2335
        %2337 = vmatmul.bf16.gmra.mxu0 %v2043
        %v2338 = vpop.f32.mrf.mxu0
        %v2339 = vadd.f32 0.0, %v2338
        %v2340 = vpop.f32.mrf.mxu0
        %v2341 = vadd.f32 0.0, %v2340
        %2342 = vmatmul.bf16.gmra.mxu0 %v2045
        %v2343 = vpop.f32.mrf.mxu0
        %v2344 = vadd.f32 0.0, %v2343
        %v2345 = vpop.f32.mrf.mxu0
        %v2346 = vadd.f32 0.0, %v2345
        %2347 = vmatmul.bf16.gmra.mxu0 %v2047
        %v2348 = vpop.f32.mrf.mxu0
        %v2349 = vadd.f32 0.0, %v2348
        %v2350 = vpop.f32.mrf.mxu0
        %v2351 = vadd.f32 0.0, %v2350
        %2352 = vmatmul.bf16.gmra.mxu0 %v2049
        %v2353 = vpop.f32.mrf.mxu0
        %v2354 = vadd.f32 0.0, %v2353
        %v2355 = vpop.f32.mrf.mxu0
        %v2356 = vadd.f32 0.0, %v2355
        %2357 = vdwg.mxu0
        %2358 = vmatpush.bf16.msra.mxu0 %v2178
        %2359 = vmatpush.bf16.msra.mxu0 %v2176
        %2360 = vmatpush.bf16.msra.mxu0 %v2174
        %2361 = vmatpush.bf16.msra.mxu0 %v2172
        %2362 = vmatpush.bf16.msra.mxu0 %v2170
        %2363 = vmatpush.bf16.msra.mxu0 %v2168
        %2364 = vmatpush.bf16.msra.mxu0 %v2166
        %2365 = vmatpush.bf16.msra.mxu0 %v2164
        %2366 = vmatmul.bf16.gmra.mxu0 %v2036
        %v2367 = vpop.f32.mrf.mxu0
        %v2368 = vadd.f32 %v2319, %v2367
        %v2369 = vpop.f32.mrf.mxu0
        %v2370 = vadd.f32 %v2321, %v2369
        %2371 = vmatmul.bf16.gmra.mxu0 %v2038
        %v2372 = vpop.f32.mrf.mxu0
        %v2373 = vadd.f32 %v2324, %v2372
        %v2374 = vpop.f32.mrf.mxu0
        %v2375 = vadd.f32 %v2326, %v2374
        %2376 = vmatmul.bf16.gmra.mxu0 %v2040
        %v2377 = vpop.f32.mrf.mxu0
        %v2378 = vadd.f32 %v2329, %v2377
        %v2379 = vpop.f32.mrf.mxu0
        %v2380 = vadd.f32 %v2331, %v2379
        %2381 = vmatmul.bf16.gmra.mxu0 %v2042
        %v2382 = vpop.f32.mrf.mxu0
        %v2383 = vadd.f32 %v2334, %v2382
        %v2384 = vpop.f32.mrf.mxu0
        %v2385 = vadd.f32 %v2336, %v2384
        %2386 = vmatmul.bf16.gmra.mxu0 %v2044
        %v2387 = vpop.f32.mrf.mxu0
        %v2388 = vadd.f32 %v2339, %v2387
        %v2389 = vpop.f32.mrf.mxu0
        %v2390 = vadd.f32 %v2341, %v2389
        %2391 = vmatmul.bf16.gmra.mxu0 %v2046
        %v2392 = vpop.f32.mrf.mxu0
        %v2393 = vadd.f32 %v2344, %v2392
        %v2394 = vpop.f32.mrf.mxu0
        %v2395 = vadd.f32 %v2346, %v2394
        %2396 = vmatmul.bf16.gmra.mxu0 %v2048
        %v2397 = vpop.f32.mrf.mxu0
        %v2398 = vadd.f32 %v2349, %v2397
        %v2399 = vpop.f32.mrf.mxu0
        %v2400 = vadd.f32 %v2351, %v2399
        %2401 = vmatmul.bf16.gmra.mxu0 %v2050
        %v2402 = vpop.f32.mrf.mxu0
        %v2403 = vadd.f32 %v2354, %v2402
        %v2404 = vpop.f32.mrf.mxu0
        %v2405 = vadd.f32 %v2356, %v2404
        %2406 = vdwg.mxu0
        %v2407 = vadd.f32 %v499, %v2270
        %v2408 = vadd.f32 %v500, %v2368
        %v2409 = vadd.f32 %v501, %v2272
        %v2410 = vadd.f32 %v502, %v2370
        %v2411 = vadd.f32 %v503, %v2275
        %v2412 = vadd.f32 %v504, %v2373
        %v2413 = vadd.f32 %v505, %v2277
        %v2414 = vadd.f32 %v506, %v2375
        %v2415 = vadd.f32 %v507, %v2280
        %v2416 = vadd.f32 %v508, %v2378
        %v2417 = vadd.f32 %v509, %v2282
        %v2418 = vadd.f32 %v510, %v2380
        %v2419 = vadd.f32 %v511, %v2285
        %v2420 = vadd.f32 %v512, %v2383
        %v2421 = vadd.f32 %v513, %v2287
        %v2422 = vadd.f32 %v514, %v2385
        %v2423 = vadd.f32 %v515, %v2290
        %v2424 = vadd.f32 %v516, %v2388
        %v2425 = vadd.f32 %v517, %v2292
        %v2426 = vadd.f32 %v518, %v2390
        %v2427 = vadd.f32 %v519, %v2295
        %v2428 = vadd.f32 %v520, %v2393
        %v2429 = vadd.f32 %v521, %v2297
        %v2430 = vadd.f32 %v522, %v2395
        %v2431 = vadd.f32 %v523, %v2300
        %v2432 = vadd.f32 %v524, %v2398
        %v2433 = vadd.f32 %v525, %v2302
        %v2434 = vadd.f32 %v526, %v2400
        %v2435 = vadd.f32 %v527, %v2305
        %v2436 = vadd.f32 %v528, %v2403
        %v2437 = vadd.f32 %v529, %v2307
        %v2438 = vadd.f32 %v530, %v2405
        %2439 = vst [vmem:[#allocation2] sm:$0xff] %v2407
        %2440 = vst [vmem:[#allocation2 + $0x8] sm:$0xff] %v2408
        %2441 = vst [vmem:[#allocation2 + $0x10] sm:$0xff] %v2409
        %2442 = vst [vmem:[#allocation2 + $0x18] sm:$0xff] %v2410
        %2443 = vst [vmem:[#allocation2 + $0x20] sm:$0xff] %v2411
        %2444 = vst [vmem:[#allocation2 + $0x28] sm:$0xff] %v2412
        %2445 = vst [vmem:[#allocation2 + $0x30] sm:$0xff] %v2413
        %2446 = vst [vmem:[#allocation2 + $0x38] sm:$0xff] %v2414
        %2447 = vst [vmem:[#allocation2 + $0x40] sm:$0xff] %v2415
        %2448 = vst [vmem:[#allocation2 + $0x48] sm:$0xff] %v2416
        %2449 = vst [vmem:[#allocation2 + $0x50] sm:$0xff] %v2417
        %2450 = vst [vmem:[#allocation2 + $0x58] sm:$0xff] %v2418
        %2451 = vst [vmem:[#allocation2 + $0x60] sm:$0xff] %v2419
        %2452 = vst [vmem:[#allocation2 + $0x68] sm:$0xff] %v2420
        %2453 = vst [vmem:[#allocation2 + $0x70] sm:$0xff] %v2421
        %2454 = vst [vmem:[#allocation2 + $0x78] sm:$0xff] %v2422
        %2455 = vst [vmem:[#allocation2 + $0x80] sm:$0xff] %v2423
        %2456 = vst [vmem:[#allocation2 + $0x88] sm:$0xff] %v2424
        %2457 = vst [vmem:[#allocation2 + $0x90] sm:$0xff] %v2425
        %2458 = vst [vmem:[#allocation2 + $0x98] sm:$0xff] %v2426
        %2459 = vst [vmem:[#allocation2 + $0xa0] sm:$0xff] %v2427
        %2460 = vst [vmem:[#allocation2 + $0xa8] sm:$0xff] %v2428
        %2461 = vst [vmem:[#allocation2 + $0xb0] sm:$0xff] %v2429
        %2462 = vst [vmem:[#allocation2 + $0xb8] sm:$0xff] %v2430
        %2463 = vst [vmem:[#allocation2 + $0xc0] sm:$0xff] %v2431
        %2464 = vst [vmem:[#allocation2 + $0xc8] sm:$0xff] %v2432
        %2465 = vst [vmem:[#allocation2 + $0xd0] sm:$0xff] %v2433
        %2466 = vst [vmem:[#allocation2 + $0xd8] sm:$0xff] %v2434
        %2467 = vst [vmem:[#allocation2 + $0xe0] sm:$0xff] %v2435
        %2468 = vst [vmem:[#allocation2 + $0xe8] sm:$0xff] %v2436
        %2469 = vst [vmem:[#allocation2 + $0xf0] sm:$0xff] %v2437
        %2470 = vst [vmem:[#allocation2 + $0xf8] sm:$0xff] %v2438
        %p2471 = scmp.eq.s32.totalorder %s25, 1
        // Predicated region
        $region89: #{tpu_custom_call.1} parent=55 // pred_check
          %p2472 = pneg %p2471
        $region90: #{tpu_custom_call.1} parent=55 // pred_check_branch
          %2474 = sbr.rel (%p2472) target = $region92
        $region91: #{tpu_custom_call.1} parent=55 // pred_region
          %v2475 = vld [vmem:[#allocation2] sm:$0xff]
          %v2476 = vld [vmem:[#allocation2 + $0x10] sm:$0xff]
          %v2477 = vld [vmem:[#allocation2 + $0x20] sm:$0xff]
          %v2478 = vld [vmem:[#allocation2 + $0x30] sm:$0xff]
          %v2479 = vld [vmem:[#allocation2 + $0x40] sm:$0xff]
          %v2480 = vld [vmem:[#allocation2 + $0x50] sm:$0xff]
          %v2481 = vld [vmem:[#allocation2 + $0x60] sm:$0xff]
          %v2482 = vld [vmem:[#allocation2 + $0x70] sm:$0xff]
          %v2483 = vld [vmem:[#allocation2 + $0x80] sm:$0xff]
          %v2484 = vld [vmem:[#allocation2 + $0x90] sm:$0xff]
          %v2485 = vld [vmem:[#allocation2 + $0xa0] sm:$0xff]
          %v2486 = vld [vmem:[#allocation2 + $0xb0] sm:$0xff]
          %v2487 = vld [vmem:[#allocation2 + $0xc0] sm:$0xff]
          %v2488 = vld [vmem:[#allocation2 + $0xd0] sm:$0xff]
          %v2489 = vld [vmem:[#allocation2 + $0xe0] sm:$0xff]
          %v2490 = vld [vmem:[#allocation2 + $0xf0] sm:$0xff]
          %2491 = vst [vmem:[#allocation15] sm:$0xff] %v2475
          %2492 = vst [vmem:[#allocation15 + $0x8] sm:$0xff] %v2476
          %2493 = vst [vmem:[#allocation15 + $0x10] sm:$0xff] %v2477
          %2494 = vst [vmem:[#allocation15 + $0x18] sm:$0xff] %v2478
          %2495 = vst [vmem:[#allocation15 + $0x20] sm:$0xff] %v2479
          %2496 = vst [vmem:[#allocation15 + $0x28] sm:$0xff] %v2480
          %2497 = vst [vmem:[#allocation15 + $0x30] sm:$0xff] %v2481
          %2498 = vst [vmem:[#allocation15 + $0x38] sm:$0xff] %v2482
          %2499 = vst [vmem:[#allocation15 + $0x40] sm:$0xff] %v2483
          %2500 = vst [vmem:[#allocation15 + $0x48] sm:$0xff] %v2484
          %2501 = vst [vmem:[#allocation15 + $0x50] sm:$0xff] %v2485
          %2502 = vst [vmem:[#allocation15 + $0x58] sm:$0xff] %v2486
          %2503 = vst [vmem:[#allocation15 + $0x60] sm:$0xff] %v2487
          %2504 = vst [vmem:[#allocation15 + $0x68] sm:$0xff] %v2488
          %2505 = vst [vmem:[#allocation15 + $0x70] sm:$0xff] %v2489
          %2506 = vst [vmem:[#allocation15 + $0x78] sm:$0xff] %v2490
        $region92: #{tpu_custom_call.1} parent=55 // pred_fallthru
          _
        // Predicated region
        $region93: #{tpu_custom_call.1} parent=55 // pred_check
          %p2507 = pneg %p227
        $region94: #{tpu_custom_call.1} parent=55 // pred_check_branch
          %2509 = sbr.rel (%p2507) target = $region96
        $region95: #{tpu_custom_call.1} parent=55 // pred_region
          %2511 = vsyncadd [#allocation5], 0
          %s2512 = sshll.u32 [#allocation15], 4
          %s2513 = int_to_ptr.vmem [resolvable:$true] %s2512
          %s2514 = sshll.u32 %s9, 4
          %s2515 = int_to_ptr.hbm [resolvable:$true] %s2514
          %2520 = dma.vmem_to_hbm [thread:$0]  %s2513, 2048, %s2515, [#allocation5], 128, 128, 8
        $region96: #{tpu_custom_call.1} parent=55 // pred_fallthru
          _
        // Predicated region
        $region97: #{tpu_custom_call.1} parent=55 // pred_check
          %p2521 = pneg %p227
        $region98: #{tpu_custom_call.1} parent=55 // pred_check_branch
          %2523 = sbr.rel (%p2521) target = $region100
        $region99: #{tpu_custom_call.1} parent=55 // pred_region
          %2525 = dma.done [#allocation5], 2048
        $region100: #{tpu_custom_call.1} parent=55 // pred_fallthru
          _
      $region56: #{tpu_custom_call.1} parent=5 // pred_fallthru
        _
      %p2526 = scmp.le.s32.totalorder 2, %s20
      // Predicated region
      $region101: #{tpu_custom_call.1} parent=5 // pred_check
        %p2527 = pneg %p2526
      $region102: #{tpu_custom_call.1} parent=5 // pred_check_branch
        %2529 = sbr.rel (%p2527) target = $region104
      $region103: #{tpu_custom_call.1} parent=5 // pred_region
        %s2530 = ssub.s32 %s20, 2
      $region104: #{tpu_custom_call.1} parent=5 // pred_fallthru
        _
    $region6: #{tpu_custom_call.1} parent=1 // loop_footer
      %s24 = sadd.s32 1, %s20
    $region7: #{tpu_custom_call.1} parent=1 // loop_footer_branch
      %19 = sbr.rel target = $region3
    $region8: #{tpu_custom_call.1} parent=1 // loop_exit
      _
    %2531 = vsyncpa [#allocation4], 1
    %s2532 = scalar_lea.sflag [#allocation4], 1
    %2533 = vsyncpa %s2532, 1
    %2534 = vsyncpa [#allocation7], 1
    %2535 = vsyncpa [#allocation10], 1
    %2536 = vsyncpa [#allocation13], 1
    %2537 = vsyncpa [#allocation5], 1
    %s2538 = scalar_lea.sflag [#allocation5], 1
    %2539 = vsyncpa %s2538, 1

</llo_original>
